<compile_context>
chip_gen: v7x
topology: tpu7x:2x2x1
jax: 0.10.0
libtpu: 0.0.40
codegen_flags: <defaults>
</compile_context>

<pallas_src>
import jax
import jax.numpy as jnp
from jax.experimental import pallas as pl
from jax.experimental.pallas import tpu as pltpu

OUTPUT_SIZE = 7
IN_FEATURES = 32 * 32 * 3          # 3072
H1, H2, H3 = 200, 100, 43          # logical (PyTorch) feature sizes
H1P, H2P, H3P, OUTP = 256, 128, 128, 128   # lane-padded feature sizes
TILE_B_MAX = 512                   # batch tile (multiple of 8 sublanes)
VMEM_LIMIT_BYTES = 32 * 1024 * 1024  # ~16 MiB live at tile 512; generous headroom


def _mlp_kernel(x_ref, w1_ref, b1_ref, w2_ref, b2_ref,
                w3_ref, b3_ref, w4_ref, b4_ref, o_ref):
    # In-kernel f32 -> bf16 cast of the input tile (VPU work, hides under DMA/MXU).
    x = x_ref[...].astype(jnp.bfloat16)
    # fc1 + relu  (bf16 inputs, f32 accumulate)
    h = jnp.dot(x, w1_ref[...], preferred_element_type=jnp.float32)
    h = jnp.maximum(h + b1_ref[...], 0.0).astype(jnp.bfloat16)
    # fc2 + relu
    h = jnp.dot(h, w2_ref[...], preferred_element_type=jnp.float32)
    h = jnp.maximum(h + b2_ref[...], 0.0).astype(jnp.bfloat16)
    # fc3 + relu
    h = jnp.dot(h, w3_ref[...], preferred_element_type=jnp.float32)
    h = jnp.maximum(h + b3_ref[...], 0.0).astype(jnp.bfloat16)
    # fc4 (no activation); store bf16, lane-dense 128-wide
    h = jnp.dot(h, w4_ref[...], preferred_element_type=jnp.float32)
    o_ref[...] = (h + b4_ref[...]).astype(o_ref.dtype)


def _round_up(n, m):
    return ((n + m - 1) // m) * m


def _pad_to(a, shape):
    return jnp.pad(a, [(0, s - d) for d, s in zip(a.shape, shape)])


def prepare_params(params):
    """One-time pad to lane-aligned shapes + bf16 cast for weights (biases stay f32)."""
    w1, b1, w2, b2, w3, b3, w4, b4 = params
    w1p = _pad_to(w1, (IN_FEATURES, H1P)).astype(jnp.bfloat16)
    b1p = _pad_to(b1, (1, H1P)).astype(jnp.float32)
    w2p = _pad_to(w2, (H1P, H2P)).astype(jnp.bfloat16)
    b2p = _pad_to(b2, (1, H2P)).astype(jnp.float32)
    w3p = _pad_to(w3, (H2P, H3P)).astype(jnp.bfloat16)
    b3p = _pad_to(b3, (1, H3P)).astype(jnp.float32)
    w4p = _pad_to(w4, (H3P, OUTP)).astype(jnp.bfloat16)
    b4p = _pad_to(b4, (1, OUTP)).astype(jnp.float32)
    return (w1p, b1p, w2p, b2p, w3p, b3p, w4p, b4p)


@jax.jit
def small_dnn_model2_forward(x_nchw, padded_params):
    """x_nchw: (B, 3, 32, 32) float32. Returns (B, 7) float32."""
    w1, b1, w2, b2, w3, b3, w4, b4 = padded_params
    B = x_nchw.shape[0]
    # Matches torch x.view(-1, 32*32*3) row-major C*H*W flatten; stays f32
    # (bf16 cast happens inside the kernel to avoid a separate HBM convert pass).
    x_flat = x_nchw.reshape(B, IN_FEATURES)

    # Pad batch only to the 8-sublane minimum (<= 7 extra rows, often none).
    b8 = _round_up(B, 8)
    if b8 != B:
        x_flat = jnp.pad(x_flat, ((0, b8 - B), (0, 0)))

    # Batch tile: multiple of 8, capped at TILE_B_MAX, and sized so the grid has
    # >= 2 steps when the batch allows it (keeps both v7x TensorCores busy).
    tile_b = min(TILE_B_MAX, max(8, _round_up(pl.cdiv(B, 2), 8)))
    grid = (pl.cdiv(b8, tile_b),)   # ragged last block OK; rows >= B dropped below

    def wspec(shape):
        # Constant block index -> stays VMEM-resident across batch tiles;
        # single buffer since it is never re-DMA'd.
        return pl.BlockSpec(shape, lambda i: (0, 0), pipeline_mode=pl.Buffered(1))

    flops = 2 * b8 * (IN_FEATURES * H1P + H1P * H2P + H2P * H3P + H3P * OUTP)
    bytes_accessed = (
        b8 * IN_FEATURES * 4                                  # x read (f32)
        + b8 * OUTP * 2                                       # padded bf16 logits
        + (w1.size + w2.size + w3.size + w4.size) * 2         # bf16 weights
        + (b1.size + b2.size + b3.size + b4.size) * 4)        # f32 biases
    cost = pl.CostEstimate(flops=flops, transcendentals=0,
                           bytes_accessed=bytes_accessed)

    out = pl.pallas_call(
        _mlp_kernel,
        out_shape=jax.ShapeDtypeStruct((b8, OUTP), jnp.bfloat16),
        grid=grid,
        in_specs=[
            pl.BlockSpec((tile_b, IN_FEATURES), lambda i: (i, 0)),
            wspec((IN_FEATURES, H1P)), wspec((1, H1P)),
            wspec((H1P, H2P)), wspec((1, H2P)),
            wspec((H2P, H3P)), wspec((1, H3P)),
            wspec((H3P, OUTP)), wspec((1, OUTP)),
        ],
        out_specs=pl.BlockSpec((tile_b, OUTP), lambda i: (i, 0)),
        compiler_params=pltpu.CompilerParams(
            dimension_semantics=("parallel",),
            vmem_limit_bytes=VMEM_LIMIT_BYTES),
        cost_estimate=cost,
    )(x_flat, w1, b1, w2, b2, w3, b3, w4, b4)

    # Strip batch padding and lane padding (only first 7 logits are real),
    # then widen to f32 for the caller.
    return out[:B, :OUTPUT_SIZE].astype(jnp.float32)


def init_params(key):
    """Deterministic synthetic params with nn.Linear-like uniform init (f32, logical shapes)."""
    def linear(key, fan_in, fan_out):
        kw, kb = jax.random.split(key)
        bound = 1.0 / jnp.sqrt(fan_in)
        w = jax.random.uniform(kw, (fan_in, fan_out), jnp.float32, -bound, bound)
        b = jax.random.uniform(kb, (1, fan_out), jnp.float32, -bound, bound)
        return w, b

    k1, k2, k3, k4 = jax.random.split(key, 4)
    w1, b1 = linear(k1, IN_FEATURES, H1)
    w2, b2 = linear(k2, H1, H2)
    w3, b3 = linear(k3, H2, H3)
    w4, b4 = linear(k4, H3, OUTPUT_SIZE)
    return (w1, b1, w2, b2, w3, b3, w4, b4)


if __name__ == "__main__":
    key = jax.random.PRNGKey(0)
    kx, kp = jax.random.split(key)

    B = 2
    x = jax.random.normal(kx, (B, 3, 32, 32), dtype=jnp.float32)  # NCHW like PyTorch
    params = init_params(kp)
    padded_params = prepare_params(params)   # pad + bf16 cast once, reused across calls

    out = small_dnn_model2_forward(x, padded_params)
    out = jax.block_until_ready(out)

    # Pure-JAX reference with the same bf16 quantization of x / weights / activations
    # (f32 accumulate). Kernel additionally rounds the final logits to bf16, hence
    # the 2e-2 tolerance (fine for argmax/softmax; tighten by using f32 output if
    # exact f32 logits are required).
    w1, b1, w2, b2, w3, b3, w4, b4 = params
    q = lambda a: a.astype(jnp.bfloat16).astype(jnp.float32)
    xf = q(x.reshape(B, IN_FEATURES))
    h = jnp.maximum(xf @ q(w1) + b1, 0.0)
    h = jnp.maximum(q(h) @ q(w2) + b2, 0.0)
    h = jnp.maximum(q(h) @ q(w3) + b3, 0.0)
    ref = q(h) @ q(w4) + b4

    assert out.shape == (B, OUTPUT_SIZE)
    assert jnp.allclose(out, ref, atol=2e-2, rtol=2e-2), (
        f"max abs err = {jnp.max(jnp.abs(out - ref))}")

    print("KERNEL_OK")
</pallas_src>

<mosaic_0001>
module attributes {stable_mosaic.version = 11 : i64} {
  func.func @_mlp_kernel(%arg0: i32, %arg1: memref<8x3072xf32, #tpu.memory_space<vmem>>, %arg2: memref<3072x256xbf16, #tpu.memory_space<vmem>>, %arg3: memref<1x256xf32, #tpu.memory_space<vmem>>, %arg4: memref<256x128xbf16, #tpu.memory_space<vmem>>, %arg5: memref<1x128xf32, #tpu.memory_space<vmem>>, %arg6: memref<128x128xbf16, #tpu.memory_space<vmem>>, %arg7: memref<1x128xf32, #tpu.memory_space<vmem>>, %arg8: memref<128x128xbf16, #tpu.memory_space<vmem>>, %arg9: memref<1x128xf32, #tpu.memory_space<vmem>>, %arg10: memref<8x128xbf16, #tpu.memory_space<vmem>>) attributes {dimension_semantics = [#tpu.dimension_semantics<parallel>], iteration_bounds = array<i64: 1>, scalar_prefetch = 0 : i64, scratch_operands = 0 : i64, tpu.core_type = #tpu.core_type<tc>, window_params = [{transform_indices = @transform_0, window_bounds = array<i64: 8, 3072>}, {pipeline_mode = #tpu.pipeline_mode<synchronous>, transform_indices = @transform_1, window_bounds = array<i64: 3072, 256>}, {pipeline_mode = #tpu.pipeline_mode<synchronous>, transform_indices = @transform_2, window_bounds = array<i64: 1, 256>}, {pipeline_mode = #tpu.pipeline_mode<synchronous>, transform_indices = @transform_3, window_bounds = array<i64: 256, 128>}, {pipeline_mode = #tpu.pipeline_mode<synchronous>, transform_indices = @transform_4, window_bounds = array<i64: 1, 128>}, {pipeline_mode = #tpu.pipeline_mode<synchronous>, transform_indices = @transform_5, window_bounds = array<i64: 128, 128>}, {pipeline_mode = #tpu.pipeline_mode<synchronous>, transform_indices = @transform_6, window_bounds = array<i64: 1, 128>}, {pipeline_mode = #tpu.pipeline_mode<synchronous>, transform_indices = @transform_7, window_bounds = array<i64: 128, 128>}, {pipeline_mode = #tpu.pipeline_mode<synchronous>, transform_indices = @transform_8, window_bounds = array<i64: 1, 128>}, {transform_indices = @transform_9, window_bounds = array<i64: 8, 128>}]} {
    %c0 = arith.constant 0 : index
    %c0_0 = arith.constant 0 : index
    %0 = vector.load %arg1[%c0, %c0_0] : memref<8x3072xf32, #tpu.memory_space<vmem>>, vector<8x3072xf32>
    %1 = arith.truncf %0 : vector<8x3072xf32> to vector<8x3072xbf16>
    %c0_1 = arith.constant 0 : index
    %c0_2 = arith.constant 0 : index
    %2 = vector.load %arg2[%c0_1, %c0_2] : memref<3072x256xbf16, #tpu.memory_space<vmem>>, vector<3072x256xbf16>
    %cst = arith.constant dense<0.000000e+00> : vector<8x256xf32>
    %3 = tpu.matmul %1, %2, %cst {dimension_numbers = #tpu.dot_dimension_numbers<[1], [0], [0], [1], [0, 0, 1, 1], [], []>} : vector<8x3072xbf16>, vector<3072x256xbf16>, vector<8x256xf32> -> vector<8x256xf32>
    %c0_3 = arith.constant 0 : index
    %c0_4 = arith.constant 0 : index
    %4 = vector.load %arg3[%c0_3, %c0_4] : memref<1x256xf32, #tpu.memory_space<vmem>>, vector<1x256xf32>
    %5 = vector.broadcast %4 : vector<1x256xf32> to vector<8x256xf32>
    %6 = arith.addf %3, %5 : vector<8x256xf32>
    %cst_5 = arith.constant 0.000000e+00 : f32
    %7 = vector.broadcast %cst_5 : f32 to vector<8x256xf32>
    %8 = arith.maximumf %6, %7 : vector<8x256xf32>
    %9 = arith.truncf %8 : vector<8x256xf32> to vector<8x256xbf16>
    %c0_6 = arith.constant 0 : index
    %c0_7 = arith.constant 0 : index
    %10 = vector.load %arg4[%c0_6, %c0_7] : memref<256x128xbf16, #tpu.memory_space<vmem>>, vector<256x128xbf16>
    %cst_8 = arith.constant dense<0.000000e+00> : vector<8x128xf32>
    %11 = tpu.matmul %9, %10, %cst_8 {dimension_numbers = #tpu.dot_dimension_numbers<[1], [0], [0], [1], [0, 0, 1, 1], [], []>} : vector<8x256xbf16>, vector<256x128xbf16>, vector<8x128xf32> -> vector<8x128xf32>
    %c0_9 = arith.constant 0 : index
    %c0_10 = arith.constant 0 : index
    %12 = vector.load %arg5[%c0_9, %c0_10] : memref<1x128xf32, #tpu.memory_space<vmem>>, vector<1x128xf32>
    %13 = vector.broadcast %12 : vector<1x128xf32> to vector<8x128xf32>
    %14 = arith.addf %11, %13 : vector<8x128xf32>
    %cst_11 = arith.constant 0.000000e+00 : f32
    %15 = vector.broadcast %cst_11 : f32 to vector<8x128xf32>
    %16 = arith.maximumf %14, %15 : vector<8x128xf32>
    %17 = arith.truncf %16 : vector<8x128xf32> to vector<8x128xbf16>
    %c0_12 = arith.constant 0 : index
    %c0_13 = arith.constant 0 : index
    %18 = vector.load %arg6[%c0_12, %c0_13] : memref<128x128xbf16, #tpu.memory_space<vmem>>, vector<128x128xbf16>
    %cst_14 = arith.constant dense<0.000000e+00> : vector<8x128xf32>
    %19 = tpu.matmul %17, %18, %cst_14 {dimension_numbers = #tpu.dot_dimension_numbers<[1], [0], [0], [1], [0, 0, 1, 1], [], []>} : vector<8x128xbf16>, vector<128x128xbf16>, vector<8x128xf32> -> vector<8x128xf32>
    %c0_15 = arith.constant 0 : index
    %c0_16 = arith.constant 0 : index
    %20 = vector.load %arg7[%c0_15, %c0_16] : memref<1x128xf32, #tpu.memory_space<vmem>>, vector<1x128xf32>
    %21 = vector.broadcast %20 : vector<1x128xf32> to vector<8x128xf32>
    %22 = arith.addf %19, %21 : vector<8x128xf32>
    %cst_17 = arith.constant 0.000000e+00 : f32
    %23 = vector.broadcast %cst_17 : f32 to vector<8x128xf32>
    %24 = arith.maximumf %22, %23 : vector<8x128xf32>
    %25 = arith.truncf %24 : vector<8x128xf32> to vector<8x128xbf16>
    %c0_18 = arith.constant 0 : index
    %c0_19 = arith.constant 0 : index
    %26 = vector.load %arg8[%c0_18, %c0_19] : memref<128x128xbf16, #tpu.memory_space<vmem>>, vector<128x128xbf16>
    %cst_20 = arith.constant dense<0.000000e+00> : vector<8x128xf32>
    %27 = tpu.matmul %25, %26, %cst_20 {dimension_numbers = #tpu.dot_dimension_numbers<[1], [0], [0], [1], [0, 0, 1, 1], [], []>} : vector<8x128xbf16>, vector<128x128xbf16>, vector<8x128xf32> -> vector<8x128xf32>
    %c0_21 = arith.constant 0 : index
    %c0_22 = arith.constant 0 : index
    %28 = vector.load %arg9[%c0_21, %c0_22] : memref<1x128xf32, #tpu.memory_space<vmem>>, vector<1x128xf32>
    %29 = vector.broadcast %28 : vector<1x128xf32> to vector<8x128xf32>
    %30 = arith.addf %27, %29 : vector<8x128xf32>
    %31 = arith.truncf %30 : vector<8x128xf32> to vector<8x128xbf16>
    %c0_23 = arith.constant 0 : index
    %c0_24 = arith.constant 0 : index
    %32 = vector.load %arg10[%c0_23, %c0_24] : memref<8x128xbf16, #tpu.memory_space<vmem>>, vector<8x128xbf16>
    tpu.vector_store %arg10[%c0_23, %c0_24], %31 {strides = array<i32>} : memref<8x128xbf16, #tpu.memory_space<vmem>>, vector<8x128xbf16>,
    return
  }
  func.func @transform_0(%arg0: i32) -> (i32, i32) {
    %c0_i32 = arith.constant 0 : i32
    %c0_i32_0 = arith.constant 0 : i32
    return %arg0, %c0_i32 : i32, i32
  }
  func.func @transform_1(%arg0: i32) -> (i32, i32) {
    %c0_i32 = arith.constant 0 : i32
    %c0_i32_0 = arith.constant 0 : i32
    %c0_i32_1 = arith.constant 0 : i32
    return %c0_i32, %c0_i32_0 : i32, i32
  }
  func.func @transform_2(%arg0: i32) -> (i32, i32) {
    %c0_i32 = arith.constant 0 : i32
    %c0_i32_0 = arith.constant 0 : i32
    %c0_i32_1 = arith.constant 0 : i32
    return %c0_i32, %c0_i32_0 : i32, i32
  }
  func.func @transform_3(%arg0: i32) -> (i32, i32) {
    %c0_i32 = arith.constant 0 : i32
    %c0_i32_0 = arith.constant 0 : i32
    %c0_i32_1 = arith.constant 0 : i32
    return %c0_i32, %c0_i32_0 : i32, i32
  }
  func.func @transform_4(%arg0: i32) -> (i32, i32) {
    %c0_i32 = arith.constant 0 : i32
    %c0_i32_0 = arith.constant 0 : i32
    %c0_i32_1 = arith.constant 0 : i32
    return %c0_i32, %c0_i32_0 : i32, i32
  }
  func.func @transform_5(%arg0: i32) -> (i32, i32) {
    %c0_i32 = arith.constant 0 : i32
    %c0_i32_0 = arith.constant 0 : i32
    %c0_i32_1 = arith.constant 0 : i32
    return %c0_i32, %c0_i32_0 : i32, i32
  }
  func.func @transform_6(%arg0: i32) -> (i32, i32) {
    %c0_i32 = arith.constant 0 : i32
    %c0_i32_0 = arith.constant 0 : i32
    %c0_i32_1 = arith.constant 0 : i32
    return %c0_i32, %c0_i32_0 : i32, i32
  }
  func.func @transform_7(%arg0: i32) -> (i32, i32) {
    %c0_i32 = arith.constant 0 : i32
    %c0_i32_0 = arith.constant 0 : i32
    %c0_i32_1 = arith.constant 0 : i32
    return %c0_i32, %c0_i32_0 : i32, i32
  }
  func.func @transform_8(%arg0: i32) -> (i32, i32) {
    %c0_i32 = arith.constant 0 : i32
    %c0_i32_0 = arith.constant 0 : i32
    %c0_i32_1 = arith.constant 0 : i32
    return %c0_i32, %c0_i32_0 : i32, i32
  }
  func.func @transform_9(%arg0: i32) -> (i32, i32) {
    %c0_i32 = arith.constant 0 : i32
    %c0_i32_0 = arith.constant 0 : i32
    return %arg0, %c0_i32 : i32, i32
  }
}

</mosaic_0001>

<llo_original>
// kernel: small_dnn_model2_forward.1
$region0: #{small_dnn_model2_forward.1}
  #allocation0 [shape = 'u32[]', space=smem, size = 0x4, offset = 0x4, fixed_abs, tag = 'smem constant byte address 0x4 - core index']
  #allocation1 [shape = 'u32[144,128]{1,0:T(1,128)}', space=vmem, size = 0x12000, scoped, tag = 'internal scratch']
  %s0 = inlined_call_operand.vmem [shape: f32[8,3072], index: 0, kind: input, shape index: {}]
  %s1 = inlined_call_operand.hbm [shape: bf16[3072,256], index: 1, kind: input, shape index: {}]
  %s2 = inlined_call_operand.hbm [shape: f32[1,256], index: 2, kind: input, shape index: {}]
  %s3 = inlined_call_operand.hbm [shape: bf16[256,128], index: 3, kind: input, shape index: {}]
  %s4 = inlined_call_operand.hbm [shape: f32[1,128], index: 4, kind: input, shape index: {}]
  %s5 = inlined_call_operand.hbm [shape: bf16[128,128], index: 5, kind: input, shape index: {}]
  %s6 = inlined_call_operand.hbm [shape: f32[1,128], index: 6, kind: input, shape index: {}]
  %s7 = inlined_call_operand.hbm [shape: bf16[128,128], index: 7, kind: input, shape index: {}]
  %s8 = inlined_call_operand.hbm [shape: f32[1,128], index: 8, kind: input, shape index: {}]
  %s9 = inlined_call_operand.vmem [shape: bf16[8,128], index: 9, kind: output, shape index: {}]
  %s10 = sld [smem:[#allocation0]]
  $region78: #{small_dnn_model2_forward.1} parent=0
    _
  %s12 = ssub.s32 1, %s10
  %s13 = scalar_select 0, %s12, %s10
  $region1: #{small_dnn_model2_forward.1} parent=0
    #allocation2 [shape = 'u8[1572864]{0}', space=vmem, size = 0x180000, scoped, tag = 'input window, operand 1, single buffered']
    #allocation3 [shape = 's32[1]{0}', space=sflag, size = 0x4, scoped, tag = 'scoped memory for small_dnn_model2_forward.1']
    #allocation4 [shape = 'u8[1024]{0}', space=vmem, size = 0x400, scoped, tag = 'input window, operand 2, single buffered']
    #allocation5 [shape = 's32[1]{0}', space=sflag, size = 0x4, scoped, tag = 'scoped memory for small_dnn_model2_forward.1']
    #allocation6 [shape = 'u8[65536]{0}', space=vmem, size = 0x10000, scoped, tag = 'input window, operand 3, single buffered']
    #allocation7 [shape = 'u8[512]{0}', space=vmem, size = 0x400, scoped, tag = 'input window, operand 4, single buffered']
    #allocation8 [shape = 's32[1]{0}', space=sflag, size = 0x4, scoped, tag = 'scoped memory for small_dnn_model2_forward.1']
    #allocation9 [shape = 'u8[32768]{0}', space=vmem, size = 0x8000, scoped, tag = 'input window, operand 5, single buffered']
    #allocation10 [shape = 'u8[512]{0}', space=vmem, size = 0x400, scoped, tag = 'input window, operand 6, single buffered']
    #allocation11 [shape = 's32[1]{0}', space=sflag, size = 0x4, scoped, tag = 'scoped memory for small_dnn_model2_forward.1']
    #allocation12 [shape = 'u8[32768]{0}', space=vmem, size = 0x8000, scoped, tag = 'input window, operand 7, single buffered']
    #allocation13 [shape = 'u8[512]{0}', space=vmem, size = 0x400, scoped, tag = 'input window, operand 8, single buffered']
    #allocation14 [shape = 's32[1]{0}', space=sflag, size = 0x4, scoped, tag = 'scoped memory for small_dnn_model2_forward.1']
    %14 = vsyncpa [#allocation3], 0
    %15 = vsyncpa [#allocation5], 0
    %16 = vsyncpa [#allocation8], 0
    %17 = vsyncpa [#allocation11], 0
    %18 = vsyncpa [#allocation14], 0
    // Predicated region
    $region2: #{small_dnn_model2_forward.1} parent=1 // pred_check
      _
    $region3: #{small_dnn_model2_forward.1} parent=1 // pred_check_branch
      %20 = sbr.rel (0) target = $region5
    $region4: #{small_dnn_model2_forward.1} parent=1 // pred_region
      _
    $region5: #{small_dnn_model2_forward.1} parent=1 // pred_fallthru
      _
    // Predicated region
    $region6: #{small_dnn_model2_forward.1} parent=1 // pred_check
      _
    $region7: #{small_dnn_model2_forward.1} parent=1 // pred_check_branch
      %22 = sbr.rel (0) target = $region9
    $region8: #{small_dnn_model2_forward.1} parent=1 // pred_region
      %s24 = ssub.s32 49152, 49152
      %25 = vsyncadd [#allocation3], %s24
      %s26 = sshll.u32 [#allocation2], 4
      %s27 = int_to_ptr.vmem [resolvable:$true] %s26
      %32 = dma.hbm_to_vmem [thread:$0]  %s1, 49152, %s27, [#allocation3], 128, 128, 8
    $region9: #{small_dnn_model2_forward.1} parent=1 // pred_fallthru
      _
    // Predicated region
    $region10: #{small_dnn_model2_forward.1} parent=1 // pred_check
      _
    $region11: #{small_dnn_model2_forward.1} parent=1 // pred_check_branch
      %34 = sbr.rel (0) target = $region13
    $region12: #{small_dnn_model2_forward.1} parent=1 // pred_region
      %s36 = ssub.s32 32, 32
      %37 = vsyncadd [#allocation5], %s36
      %s39 = sshll.u32 [#allocation4], 4
      %s40 = int_to_ptr.vmem [resolvable:$true] %s39
      %42 = dma.hbm_to_vmem [thread:$0]  %s2, 32, %s40, [#allocation5]
    $region13: #{small_dnn_model2_forward.1} parent=1 // pred_fallthru
      _
    // Predicated region
    $region14: #{small_dnn_model2_forward.1} parent=1 // pred_check
      _
    $region15: #{small_dnn_model2_forward.1} parent=1 // pred_check_branch
      %44 = sbr.rel (0) target = $region17
    $region16: #{small_dnn_model2_forward.1} parent=1 // pred_region
      %s46 = ssub.s32 2048, 2048
      %47 = vsyncadd [#allocation5], %s46
      %s48 = sshll.u32 [#allocation6], 4
      %s49 = int_to_ptr.vmem [resolvable:$true] %s48
      %54 = dma.hbm_to_vmem [thread:$0]  %s3, 2048, %s49, [#allocation5], 64, 64, 4
    $region17: #{small_dnn_model2_forward.1} parent=1 // pred_fallthru
      _
    // Predicated region
    $region18: #{small_dnn_model2_forward.1} parent=1 // pred_check
      _
    $region19: #{small_dnn_model2_forward.1} parent=1 // pred_check_branch
      %56 = sbr.rel (0) target = $region21
    $region20: #{small_dnn_model2_forward.1} parent=1 // pred_region
      %s58 = ssub.s32 16, 16
      %59 = vsyncadd [#allocation8], %s58
      %s61 = sshll.u32 [#allocation7], 4
      %s62 = int_to_ptr.vmem [resolvable:$true] %s61
      %64 = dma.hbm_to_vmem [thread:$0]  %s4, 16, %s62, [#allocation8]
    $region21: #{small_dnn_model2_forward.1} parent=1 // pred_fallthru
      _
    // Predicated region
    $region22: #{small_dnn_model2_forward.1} parent=1 // pred_check
      _
    $region23: #{small_dnn_model2_forward.1} parent=1 // pred_check_branch
      %66 = sbr.rel (0) target = $region25
    $region24: #{small_dnn_model2_forward.1} parent=1 // pred_region
      %s68 = ssub.s32 1024, 1024
      %69 = vsyncadd [#allocation8], %s68
      %s70 = sshll.u32 [#allocation9], 4
      %s71 = int_to_ptr.vmem [resolvable:$true] %s70
      %76 = dma.hbm_to_vmem [thread:$0]  %s5, 1024, %s71, [#allocation8], 64, 64, 4
    $region25: #{small_dnn_model2_forward.1} parent=1 // pred_fallthru
      _
    // Predicated region
    $region26: #{small_dnn_model2_forward.1} parent=1 // pred_check
      _
    $region27: #{small_dnn_model2_forward.1} parent=1 // pred_check_branch
      %78 = sbr.rel (0) target = $region29
    $region28: #{small_dnn_model2_forward.1} parent=1 // pred_region
      %s80 = ssub.s32 16, 16
      %81 = vsyncadd [#allocation11], %s80
      %s83 = sshll.u32 [#allocation10], 4
      %s84 = int_to_ptr.vmem [resolvable:$true] %s83
      %86 = dma.hbm_to_vmem [thread:$0]  %s6, 16, %s84, [#allocation11]
    $region29: #{small_dnn_model2_forward.1} parent=1 // pred_fallthru
      _
    // Predicated region
    $region30: #{small_dnn_model2_forward.1} parent=1 // pred_check
      _
    $region31: #{small_dnn_model2_forward.1} parent=1 // pred_check_branch
      %88 = sbr.rel (0) target = $region33
    $region32: #{small_dnn_model2_forward.1} parent=1 // pred_region
      %s90 = ssub.s32 1024, 1024
      %91 = vsyncadd [#allocation11], %s90
      %s92 = sshll.u32 [#allocation12], 4
      %s93 = int_to_ptr.vmem [resolvable:$true] %s92
      %98 = dma.hbm_to_vmem [thread:$0]  %s7, 1024, %s93, [#allocation11], 64, 64, 4
    $region33: #{small_dnn_model2_forward.1} parent=1 // pred_fallthru
      _
    // Predicated region
    $region34: #{small_dnn_model2_forward.1} parent=1 // pred_check
      _
    $region35: #{small_dnn_model2_forward.1} parent=1 // pred_check_branch
      %100 = sbr.rel (0) target = $region37
    $region36: #{small_dnn_model2_forward.1} parent=1 // pred_region
      %s102 = ssub.s32 16, 16
      %103 = vsyncadd [#allocation14], %s102
      %s105 = sshll.u32 [#allocation13], 4
      %s106 = int_to_ptr.vmem [resolvable:$true] %s105
      %108 = dma.hbm_to_vmem [thread:$0]  %s8, 16, %s106, [#allocation14]
    $region37: #{small_dnn_model2_forward.1} parent=1 // pred_fallthru
      _
    // Predicated region
    $region38: #{small_dnn_model2_forward.1} parent=1 // pred_check
      _
    $region39: #{small_dnn_model2_forward.1} parent=1 // pred_check_branch
      %110 = sbr.rel (0) target = $region41
    $region40: #{small_dnn_model2_forward.1} parent=1 // pred_region
      %111 = dma.done [#allocation3], 49152
    $region41: #{small_dnn_model2_forward.1} parent=1 // pred_fallthru
      _
    // Predicated region
    $region42: #{small_dnn_model2_forward.1} parent=1 // pred_check
      _
    $region43: #{small_dnn_model2_forward.1} parent=1 // pred_check_branch
      %113 = sbr.rel (0) target = $region45
    $region44: #{small_dnn_model2_forward.1} parent=1 // pred_region
      %114 = dma.done [#allocation5], 32
    $region45: #{small_dnn_model2_forward.1} parent=1 // pred_fallthru
      _
    // Predicated region
    $region46: #{small_dnn_model2_forward.1} parent=1 // pred_check
      _
    $region47: #{small_dnn_model2_forward.1} parent=1 // pred_check_branch
      %116 = sbr.rel (0) target = $region49
    $region48: #{small_dnn_model2_forward.1} parent=1 // pred_region
      %117 = dma.done [#allocation5], 2048
    $region49: #{small_dnn_model2_forward.1} parent=1 // pred_fallthru
      _
    // Predicated region
    $region50: #{small_dnn_model2_forward.1} parent=1 // pred_check
      _
    $region51: #{small_dnn_model2_forward.1} parent=1 // pred_check_branch
      %119 = sbr.rel (0) target = $region53
    $region52: #{small_dnn_model2_forward.1} parent=1 // pred_region
      %120 = dma.done [#allocation8], 16
    $region53: #{small_dnn_model2_forward.1} parent=1 // pred_fallthru
      _
    // Predicated region
    $region54: #{small_dnn_model2_forward.1} parent=1 // pred_check
      _
    $region55: #{small_dnn_model2_forward.1} parent=1 // pred_check_branch
      %122 = sbr.rel (0) target = $region57
    $region56: #{small_dnn_model2_forward.1} parent=1 // pred_region
      %123 = dma.done [#allocation8], 1024
    $region57: #{small_dnn_model2_forward.1} parent=1 // pred_fallthru
      _
    // Predicated region
    $region58: #{small_dnn_model2_forward.1} parent=1 // pred_check
      _
    $region59: #{small_dnn_model2_forward.1} parent=1 // pred_check_branch
      %125 = sbr.rel (0) target = $region61
    $region60: #{small_dnn_model2_forward.1} parent=1 // pred_region
      %126 = dma.done [#allocation11], 16
    $region61: #{small_dnn_model2_forward.1} parent=1 // pred_fallthru
      _
    // Predicated region
    $region62: #{small_dnn_model2_forward.1} parent=1 // pred_check
      _
    $region63: #{small_dnn_model2_forward.1} parent=1 // pred_check_branch
      %128 = sbr.rel (0) target = $region65
    $region64: #{small_dnn_model2_forward.1} parent=1 // pred_region
      %129 = dma.done [#allocation11], 1024
    $region65: #{small_dnn_model2_forward.1} parent=1 // pred_fallthru
      _
    // Predicated region
    $region66: #{small_dnn_model2_forward.1} parent=1 // pred_check
      _
    $region67: #{small_dnn_model2_forward.1} parent=1 // pred_check_branch
      %131 = sbr.rel (0) target = $region69
    $region68: #{small_dnn_model2_forward.1} parent=1 // pred_region
      %132 = dma.done [#allocation14], 16
    $region69: #{small_dnn_model2_forward.1} parent=1 // pred_fallthru
      _
    %v134 = vld [vmem:[%s0] sm:$0xff]
    %v135 = vld [vmem:[%s0 + $0x8] sm:$0xff]
    %v136 = vld [vmem:[%s0 + $0x10] sm:$0xff]
    %v137 = vld [vmem:[%s0 + $0x18] sm:$0xff]
    %v138 = vld [vmem:[%s0 + $0x20] sm:$0xff]
    %v139 = vld [vmem:[%s0 + $0x28] sm:$0xff]
    %v140 = vld [vmem:[%s0 + $0x30] sm:$0xff]
    %v141 = vld [vmem:[%s0 + $0x38] sm:$0xff]
    %v142 = vld [vmem:[%s0 + $0x40] sm:$0xff]
    %v143 = vld [vmem:[%s0 + $0x48] sm:$0xff]
    %v144 = vld [vmem:[%s0 + $0x50] sm:$0xff]
    %v145 = vld [vmem:[%s0 + $0x58] sm:$0xff]
    %v146 = vld [vmem:[%s0 + $0x60] sm:$0xff]
    %v147 = vld [vmem:[%s0 + $0x68] sm:$0xff]
    %v148 = vld [vmem:[%s0 + $0x70] sm:$0xff]
    %v149 = vld [vmem:[%s0 + $0x78] sm:$0xff]
    %v150 = vld [vmem:[%s0 + $0x80] sm:$0xff]
    %v151 = vld [vmem:[%s0 + $0x88] sm:$0xff]
    %v152 = vld [vmem:[%s0 + $0x90] sm:$0xff]
    %v153 = vld [vmem:[%s0 + $0x98] sm:$0xff]
    %v154 = vld [vmem:[%s0 + $0xa0] sm:$0xff]
    %v155 = vld [vmem:[%s0 + $0xa8] sm:$0xff]
    %v156 = vld [vmem:[%s0 + $0xb0] sm:$0xff]
    %v157 = vld [vmem:[%s0 + $0xb8] sm:$0xff]
    %v158 = vpack.c.bf16 %v134, %v134
    %v159 = vpack.c.bf16 %v135, %v135
    %v160 = vpack.c.bf16 %v136, %v136
    %v161 = vpack.c.bf16 %v137, %v137
    %v162 = vpack.c.bf16 %v138, %v138
    %v163 = vpack.c.bf16 %v139, %v139
    %v164 = vpack.c.bf16 %v140, %v140
    %v165 = vpack.c.bf16 %v141, %v141
    %v166 = vpack.c.bf16 %v142, %v142
    %v167 = vpack.c.bf16 %v143, %v143
    %v168 = vpack.c.bf16 %v144, %v144
    %v169 = vpack.c.bf16 %v145, %v145
    %v170 = vpack.c.bf16 %v146, %v146
    %v171 = vpack.c.bf16 %v147, %v147
    %v172 = vpack.c.bf16 %v148, %v148
    %v173 = vpack.c.bf16 %v149, %v149
    %v174 = vpack.c.bf16 %v150, %v150
    %v175 = vpack.c.bf16 %v151, %v151
    %v176 = vpack.c.bf16 %v152, %v152
    %v177 = vpack.c.bf16 %v153, %v153
    %v178 = vpack.c.bf16 %v154, %v154
    %v179 = vpack.c.bf16 %v155, %v155
    %v180 = vpack.c.bf16 %v156, %v156
    %v181 = vpack.c.bf16 %v157, %v157
    %v182 = vld [vmem:[#allocation2] sm:$0xff]
    %v183 = vld [vmem:[#allocation2 + $0x8] sm:$0xff]
    %v184 = vld [vmem:[#allocation2 + $0x10] sm:$0xff]
    %v185 = vld [vmem:[#allocation2 + $0x18] sm:$0xff]
    %v186 = vld [vmem:[#allocation2 + $0x20] sm:$0xff]
    %v187 = vld [vmem:[#allocation2 + $0x28] sm:$0xff]
    %v188 = vld [vmem:[#allocation2 + $0x30] sm:$0xff]
    %v189 = vld [vmem:[#allocation2 + $0x38] sm:$0xff]
    %v190 = vld [vmem:[#allocation2 + $0x40] sm:$0xff]
    %v191 = vld [vmem:[#allocation2 + $0x48] sm:$0xff]
    %v192 = vld [vmem:[#allocation2 + $0x50] sm:$0xff]
    %v193 = vld [vmem:[#allocation2 + $0x58] sm:$0xff]
    %v194 = vld [vmem:[#allocation2 + $0x60] sm:$0xff]
    %v195 = vld [vmem:[#allocation2 + $0x68] sm:$0xff]
    %v196 = vld [vmem:[#allocation2 + $0x70] sm:$0xff]
    %v197 = vld [vmem:[#allocation2 + $0x78] sm:$0xff]
    %v198 = vld [vmem:[#allocation2 + $0x80] sm:$0xff]
    %v199 = vld [vmem:[#allocation2 + $0x88] sm:$0xff]
    %v200 = vld [vmem:[#allocation2 + $0x90] sm:$0xff]
    %v201 = vld [vmem:[#allocation2 + $0x98] sm:$0xff]
    %v202 = vld [vmem:[#allocation2 + $0xa0] sm:$0xff]
    %v203 = vld [vmem:[#allocation2 + $0xa8] sm:$0xff]
    %v204 = vld [vmem:[#allocation2 + $0xb0] sm:$0xff]
    %v205 = vld [vmem:[#allocation2 + $0xb8] sm:$0xff]
    %v206 = vld [vmem:[#allocation2 + $0xc0] sm:$0xff]
    %v207 = vld [vmem:[#allocation2 + $0xc8] sm:$0xff]
    %v208 = vld [vmem:[#allocation2 + $0xd0] sm:$0xff]
    %v209 = vld [vmem:[#allocation2 + $0xd8] sm:$0xff]
    %v210 = vld [vmem:[#allocation2 + $0xe0] sm:$0xff]
    %v211 = vld [vmem:[#allocation2 + $0xe8] sm:$0xff]
    %v212 = vld [vmem:[#allocation2 + $0xf0] sm:$0xff]
    %v213 = vld [vmem:[#allocation2 + $0xf8] sm:$0xff]
    %v214 = vld [vmem:[#allocation2 + $0x100] sm:$0xff]
    %v215 = vld [vmem:[#allocation2 + $0x108] sm:$0xff]
    %v216 = vld [vmem:[#allocation2 + $0x110] sm:$0xff]
    %v217 = vld [vmem:[#allocation2 + $0x118] sm:$0xff]
    %v218 = vld [vmem:[#allocation2 + $0x120] sm:$0xff]
    %v219 = vld [vmem:[#allocation2 + $0x128] sm:$0xff]
    %v220 = vld [vmem:[#allocation2 + $0x130] sm:$0xff]
    %v221 = vld [vmem:[#allocation2 + $0x138] sm:$0xff]
    %v222 = vld [vmem:[#allocation2 + $0x140] sm:$0xff]
    %v223 = vld [vmem:[#allocation2 + $0x148] sm:$0xff]
    %v224 = vld [vmem:[#allocation2 + $0x150] sm:$0xff]
    %v225 = vld [vmem:[#allocation2 + $0x158] sm:$0xff]
    %v226 = vld [vmem:[#allocation2 + $0x160] sm:$0xff]
    %v227 = vld [vmem:[#allocation2 + $0x168] sm:$0xff]
    %v228 = vld [vmem:[#allocation2 + $0x170] sm:$0xff]
    %v229 = vld [vmem:[#allocation2 + $0x178] sm:$0xff]
    %v230 = vld [vmem:[#allocation2 + $0x180] sm:$0xff]
    %v231 = vld [vmem:[#allocation2 + $0x188] sm:$0xff]
    %v232 = vld [vmem:[#allocation2 + $0x190] sm:$0xff]
    %v233 = vld [vmem:[#allocation2 + $0x198] sm:$0xff]
    %v234 = vld [vmem:[#allocation2 + $0x1a0] sm:$0xff]
    %v235 = vld [vmem:[#allocation2 + $0x1a8] sm:$0xff]
    %v236 = vld [vmem:[#allocation2 + $0x1b0] sm:$0xff]
    %v237 = vld [vmem:[#allocation2 + $0x1b8] sm:$0xff]
    %v238 = vld [vmem:[#allocation2 + $0x1c0] sm:$0xff]
    %v239 = vld [vmem:[#allocation2 + $0x1c8] sm:$0xff]
    %v240 = vld [vmem:[#allocation2 + $0x1d0] sm:$0xff]
    %v241 = vld [vmem:[#allocation2 + $0x1d8] sm:$0xff]
    %v242 = vld [vmem:[#allocation2 + $0x1e0] sm:$0xff]
    %v243 = vld [vmem:[#allocation2 + $0x1e8] sm:$0xff]
    %v244 = vld [vmem:[#allocation2 + $0x1f0] sm:$0xff]
    %v245 = vld [vmem:[#allocation2 + $0x1f8] sm:$0xff]
    %v246 = vld [vmem:[#allocation2 + $0x200] sm:$0xff]
    %v247 = vld [vmem:[#allocation2 + $0x208] sm:$0xff]
    %v248 = vld [vmem:[#allocation2 + $0x210] sm:$0xff]
    %v249 = vld [vmem:[#allocation2 + $0x218] sm:$0xff]
    %v250 = vld [vmem:[#allocation2 + $0x220] sm:$0xff]
    %v251 = vld [vmem:[#allocation2 + $0x228] sm:$0xff]
    %v252 = vld [vmem:[#allocation2 + $0x230] sm:$0xff]
    %v253 = vld [vmem:[#allocation2 + $0x238] sm:$0xff]
    %v254 = vld [vmem:[#allocation2 + $0x240] sm:$0xff]
    %v255 = vld [vmem:[#allocation2 + $0x248] sm:$0xff]
    %v256 = vld [vmem:[#allocation2 + $0x250] sm:$0xff]
    %v257 = vld [vmem:[#allocation2 + $0x258] sm:$0xff]
    %v258 = vld [vmem:[#allocation2 + $0x260] sm:$0xff]
    %v259 = vld [vmem:[#allocation2 + $0x268] sm:$0xff]
    %v260 = vld [vmem:[#allocation2 + $0x270] sm:$0xff]
    %v261 = vld [vmem:[#allocation2 + $0x278] sm:$0xff]
    %v262 = vld [vmem:[#allocation2 + $0x280] sm:$0xff]
    %v263 = vld [vmem:[#allocation2 + $0x288] sm:$0xff]
    %v264 = vld [vmem:[#allocation2 + $0x290] sm:$0xff]
    %v265 = vld [vmem:[#allocation2 + $0x298] sm:$0xff]
    %v266 = vld [vmem:[#allocation2 + $0x2a0] sm:$0xff]
    %v267 = vld [vmem:[#allocation2 + $0x2a8] sm:$0xff]
    %v268 = vld [vmem:[#allocation2 + $0x2b0] sm:$0xff]
    %v269 = vld [vmem:[#allocation2 + $0x2b8] sm:$0xff]
    %v270 = vld [vmem:[#allocation2 + $0x2c0] sm:$0xff]
    %v271 = vld [vmem:[#allocation2 + $0x2c8] sm:$0xff]
    %v272 = vld [vmem:[#allocation2 + $0x2d0] sm:$0xff]
    %v273 = vld [vmem:[#allocation2 + $0x2d8] sm:$0xff]
    %v274 = vld [vmem:[#allocation2 + $0x2e0] sm:$0xff]
    %v275 = vld [vmem:[#allocation2 + $0x2e8] sm:$0xff]
    %v276 = vld [vmem:[#allocation2 + $0x2f0] sm:$0xff]
    %v277 = vld [vmem:[#allocation2 + $0x2f8] sm:$0xff]
    %v278 = vld [vmem:[#allocation2 + $0x300] sm:$0xff]
    %v279 = vld [vmem:[#allocation2 + $0x308] sm:$0xff]
    %v280 = vld [vmem:[#allocation2 + $0x310] sm:$0xff]
    %v281 = vld [vmem:[#allocation2 + $0x318] sm:$0xff]
    %v282 = vld [vmem:[#allocation2 + $0x320] sm:$0xff]
    %v283 = vld [vmem:[#allocation2 + $0x328] sm:$0xff]
    %v284 = vld [vmem:[#allocation2 + $0x330] sm:$0xff]
    %v285 = vld [vmem:[#allocation2 + $0x338] sm:$0xff]
    %v286 = vld [vmem:[#allocation2 + $0x340] sm:$0xff]
    %v287 = vld [vmem:[#allocation2 + $0x348] sm:$0xff]
    %v288 = vld [vmem:[#allocation2 + $0x350] sm:$0xff]
    %v289 = vld [vmem:[#allocation2 + $0x358] sm:$0xff]
    %v290 = vld [vmem:[#allocation2 + $0x360] sm:$0xff]
    %v291 = vld [vmem:[#allocation2 + $0x368] sm:$0xff]
    %v292 = vld [vmem:[#allocation2 + $0x370] sm:$0xff]
    %v293 = vld [vmem:[#allocation2 + $0x378] sm:$0xff]
    %v294 = vld [vmem:[#allocation2 + $0x380] sm:$0xff]
    %v295 = vld [vmem:[#allocation2 + $0x388] sm:$0xff]
    %v296 = vld [vmem:[#allocation2 + $0x390] sm:$0xff]
    %v297 = vld [vmem:[#allocation2 + $0x398] sm:$0xff]
    %v298 = vld [vmem:[#allocation2 + $0x3a0] sm:$0xff]
    %v299 = vld [vmem:[#allocation2 + $0x3a8] sm:$0xff]
    %v300 = vld [vmem:[#allocation2 + $0x3b0] sm:$0xff]
    %v301 = vld [vmem:[#allocation2 + $0x3b8] sm:$0xff]
    %v302 = vld [vmem:[#allocation2 + $0x3c0] sm:$0xff]
    %v303 = vld [vmem:[#allocation2 + $0x3c8] sm:$0xff]
    %v304 = vld [vmem:[#allocation2 + $0x3d0] sm:$0xff]
    %v305 = vld [vmem:[#allocation2 + $0x3d8] sm:$0xff]
    %v306 = vld [vmem:[#allocation2 + $0x3e0] sm:$0xff]
    %v307 = vld [vmem:[#allocation2 + $0x3e8] sm:$0xff]
    %v308 = vld [vmem:[#allocation2 + $0x3f0] sm:$0xff]
    %v309 = vld [vmem:[#allocation2 + $0x3f8] sm:$0xff]
    %v310 = vld [vmem:[#allocation2 + $0x400] sm:$0xff]
    %v311 = vld [vmem:[#allocation2 + $0x408] sm:$0xff]
    %v312 = vld [vmem:[#allocation2 + $0x410] sm:$0xff]
    %v313 = vld [vmem:[#allocation2 + $0x418] sm:$0xff]
    %v314 = vld [vmem:[#allocation2 + $0x420] sm:$0xff]
    %v315 = vld [vmem:[#allocation2 + $0x428] sm:$0xff]
    %v316 = vld [vmem:[#allocation2 + $0x430] sm:$0xff]
    %v317 = vld [vmem:[#allocation2 + $0x438] sm:$0xff]
    %v318 = vld [vmem:[#allocation2 + $0x440] sm:$0xff]
    %v319 = vld [vmem:[#allocation2 + $0x448] sm:$0xff]
    %v320 = vld [vmem:[#allocation2 + $0x450] sm:$0xff]
    %v321 = vld [vmem:[#allocation2 + $0x458] sm:$0xff]
    %v322 = vld [vmem:[#allocation2 + $0x460] sm:$0xff]
    %v323 = vld [vmem:[#allocation2 + $0x468] sm:$0xff]
    %v324 = vld [vmem:[#allocation2 + $0x470] sm:$0xff]
    %v325 = vld [vmem:[#allocation2 + $0x478] sm:$0xff]
    %v326 = vld [vmem:[#allocation2 + $0x480] sm:$0xff]
    %v327 = vld [vmem:[#allocation2 + $0x488] sm:$0xff]
    %v328 = vld [vmem:[#allocation2 + $0x490] sm:$0xff]
    %v329 = vld [vmem:[#allocation2 + $0x498] sm:$0xff]
    %v330 = vld [vmem:[#allocation2 + $0x4a0] sm:$0xff]
    %v331 = vld [vmem:[#allocation2 + $0x4a8] sm:$0xff]
    %v332 = vld [vmem:[#allocation2 + $0x4b0] sm:$0xff]
    %v333 = vld [vmem:[#allocation2 + $0x4b8] sm:$0xff]
    %v334 = vld [vmem:[#allocation2 + $0x4c0] sm:$0xff]
    %v335 = vld [vmem:[#allocation2 + $0x4c8] sm:$0xff]
    %v336 = vld [vmem:[#allocation2 + $0x4d0] sm:$0xff]
    %v337 = vld [vmem:[#allocation2 + $0x4d8] sm:$0xff]
    %v338 = vld [vmem:[#allocation2 + $0x4e0] sm:$0xff]
    %v339 = vld [vmem:[#allocation2 + $0x4e8] sm:$0xff]
    %v340 = vld [vmem:[#allocation2 + $0x4f0] sm:$0xff]
    %v341 = vld [vmem:[#allocation2 + $0x4f8] sm:$0xff]
    %v342 = vld [vmem:[#allocation2 + $0x500] sm:$0xff]
    %v343 = vld [vmem:[#allocation2 + $0x508] sm:$0xff]
    %v344 = vld [vmem:[#allocation2 + $0x510] sm:$0xff]
    %v345 = vld [vmem:[#allocation2 + $0x518] sm:$0xff]
    %v346 = vld [vmem:[#allocation2 + $0x520] sm:$0xff]
    %v347 = vld [vmem:[#allocation2 + $0x528] sm:$0xff]
    %v348 = vld [vmem:[#allocation2 + $0x530] sm:$0xff]
    %v349 = vld [vmem:[#allocation2 + $0x538] sm:$0xff]
    %v350 = vld [vmem:[#allocation2 + $0x540] sm:$0xff]
    %v351 = vld [vmem:[#allocation2 + $0x548] sm:$0xff]
    %v352 = vld [vmem:[#allocation2 + $0x550] sm:$0xff]
    %v353 = vld [vmem:[#allocation2 + $0x558] sm:$0xff]
    %v354 = vld [vmem:[#allocation2 + $0x560] sm:$0xff]
    %v355 = vld [vmem:[#allocation2 + $0x568] sm:$0xff]
    %v356 = vld [vmem:[#allocation2 + $0x570] sm:$0xff]
    %v357 = vld [vmem:[#allocation2 + $0x578] sm:$0xff]
    %v358 = vld [vmem:[#allocation2 + $0x580] sm:$0xff]
    %v359 = vld [vmem:[#allocation2 + $0x588] sm:$0xff]
    %v360 = vld [vmem:[#allocation2 + $0x590] sm:$0xff]
    %v361 = vld [vmem:[#allocation2 + $0x598] sm:$0xff]
    %v362 = vld [vmem:[#allocation2 + $0x5a0] sm:$0xff]
    %v363 = vld [vmem:[#allocation2 + $0x5a8] sm:$0xff]
    %v364 = vld [vmem:[#allocation2 + $0x5b0] sm:$0xff]
    %v365 = vld [vmem:[#allocation2 + $0x5b8] sm:$0xff]
    %v366 = vld [vmem:[#allocation2 + $0x5c0] sm:$0xff]
    %v367 = vld [vmem:[#allocation2 + $0x5c8] sm:$0xff]
    %v368 = vld [vmem:[#allocation2 + $0x5d0] sm:$0xff]
    %v369 = vld [vmem:[#allocation2 + $0x5d8] sm:$0xff]
    %v370 = vld [vmem:[#allocation2 + $0x5e0] sm:$0xff]
    %v371 = vld [vmem:[#allocation2 + $0x5e8] sm:$0xff]
    %v372 = vld [vmem:[#allocation2 + $0x5f0] sm:$0xff]
    %v373 = vld [vmem:[#allocation2 + $0x5f8] sm:$0xff]
    %v374 = vld [vmem:[#allocation2 + $0x600] sm:$0xff]
    %v375 = vld [vmem:[#allocation2 + $0x608] sm:$0xff]
    %v376 = vld [vmem:[#allocation2 + $0x610] sm:$0xff]
    %v377 = vld [vmem:[#allocation2 + $0x618] sm:$0xff]
    %v378 = vld [vmem:[#allocation2 + $0x620] sm:$0xff]
    %v379 = vld [vmem:[#allocation2 + $0x628] sm:$0xff]
    %v380 = vld [vmem:[#allocation2 + $0x630] sm:$0xff]
    %v381 = vld [vmem:[#allocation2 + $0x638] sm:$0xff]
    %v382 = vld [vmem:[#allocation2 + $0x640] sm:$0xff]
    %v383 = vld [vmem:[#allocation2 + $0x648] sm:$0xff]
    %v384 = vld [vmem:[#allocation2 + $0x650] sm:$0xff]
    %v385 = vld [vmem:[#allocation2 + $0x658] sm:$0xff]
    %v386 = vld [vmem:[#allocation2 + $0x660] sm:$0xff]
    %v387 = vld [vmem:[#allocation2 + $0x668] sm:$0xff]
    %v388 = vld [vmem:[#allocation2 + $0x670] sm:$0xff]
    %v389 = vld [vmem:[#allocation2 + $0x678] sm:$0xff]
    %v390 = vld [vmem:[#allocation2 + $0x680] sm:$0xff]
    %v391 = vld [vmem:[#allocation2 + $0x688] sm:$0xff]
    %v392 = vld [vmem:[#allocation2 + $0x690] sm:$0xff]
    %v393 = vld [vmem:[#allocation2 + $0x698] sm:$0xff]
    %v394 = vld [vmem:[#allocation2 + $0x6a0] sm:$0xff]
    %v395 = vld [vmem:[#allocation2 + $0x6a8] sm:$0xff]
    %v396 = vld [vmem:[#allocation2 + $0x6b0] sm:$0xff]
    %v397 = vld [vmem:[#allocation2 + $0x6b8] sm:$0xff]
    %v398 = vld [vmem:[#allocation2 + $0x6c0] sm:$0xff]
    %v399 = vld [vmem:[#allocation2 + $0x6c8] sm:$0xff]
    %v400 = vld [vmem:[#allocation2 + $0x6d0] sm:$0xff]
    %v401 = vld [vmem:[#allocation2 + $0x6d8] sm:$0xff]
    %v402 = vld [vmem:[#allocation2 + $0x6e0] sm:$0xff]
    %v403 = vld [vmem:[#allocation2 + $0x6e8] sm:$0xff]
    %v404 = vld [vmem:[#allocation2 + $0x6f0] sm:$0xff]
    %v405 = vld [vmem:[#allocation2 + $0x6f8] sm:$0xff]
    %v406 = vld [vmem:[#allocation2 + $0x700] sm:$0xff]
    %v407 = vld [vmem:[#allocation2 + $0x708] sm:$0xff]
    %v408 = vld [vmem:[#allocation2 + $0x710] sm:$0xff]
    %v409 = vld [vmem:[#allocation2 + $0x718] sm:$0xff]
    %v410 = vld [vmem:[#allocation2 + $0x720] sm:$0xff]
    %v411 = vld [vmem:[#allocation2 + $0x728] sm:$0xff]
    %v412 = vld [vmem:[#allocation2 + $0x730] sm:$0xff]
    %v413 = vld [vmem:[#allocation2 + $0x738] sm:$0xff]
    %v414 = vld [vmem:[#allocation2 + $0x740] sm:$0xff]
    %v415 = vld [vmem:[#allocation2 + $0x748] sm:$0xff]
    %v416 = vld [vmem:[#allocation2 + $0x750] sm:$0xff]
    %v417 = vld [vmem:[#allocation2 + $0x758] sm:$0xff]
    %v418 = vld [vmem:[#allocation2 + $0x760] sm:$0xff]
    %v419 = vld [vmem:[#allocation2 + $0x768] sm:$0xff]
    %v420 = vld [vmem:[#allocation2 + $0x770] sm:$0xff]
    %v421 = vld [vmem:[#allocation2 + $0x778] sm:$0xff]
    %v422 = vld [vmem:[#allocation2 + $0x780] sm:$0xff]
    %v423 = vld [vmem:[#allocation2 + $0x788] sm:$0xff]
    %v424 = vld [vmem:[#allocation2 + $0x790] sm:$0xff]
    %v425 = vld [vmem:[#allocation2 + $0x798] sm:$0xff]
    %v426 = vld [vmem:[#allocation2 + $0x7a0] sm:$0xff]
    %v427 = vld [vmem:[#allocation2 + $0x7a8] sm:$0xff]
    %v428 = vld [vmem:[#allocation2 + $0x7b0] sm:$0xff]
    %v429 = vld [vmem:[#allocation2 + $0x7b8] sm:$0xff]
    %v430 = vld [vmem:[#allocation2 + $0x7c0] sm:$0xff]
    %v431 = vld [vmem:[#allocation2 + $0x7c8] sm:$0xff]
    %v432 = vld [vmem:[#allocation2 + $0x7d0] sm:$0xff]
    %v433 = vld [vmem:[#allocation2 + $0x7d8] sm:$0xff]
    %v434 = vld [vmem:[#allocation2 + $0x7e0] sm:$0xff]
    %v435 = vld [vmem:[#allocation2 + $0x7e8] sm:$0xff]
    %v436 = vld [vmem:[#allocation2 + $0x7f0] sm:$0xff]
    %v437 = vld [vmem:[#allocation2 + $0x7f8] sm:$0xff]
    %v438 = vld [vmem:[#allocation2 + $0x800] sm:$0xff]
    %v439 = vld [vmem:[#allocation2 + $0x808] sm:$0xff]
    %v440 = vld [vmem:[#allocation2 + $0x810] sm:$0xff]
    %v441 = vld [vmem:[#allocation2 + $0x818] sm:$0xff]
    %v442 = vld [vmem:[#allocation2 + $0x820] sm:$0xff]
    %v443 = vld [vmem:[#allocation2 + $0x828] sm:$0xff]
    %v444 = vld [vmem:[#allocation2 + $0x830] sm:$0xff]
    %v445 = vld [vmem:[#allocation2 + $0x838] sm:$0xff]
    %v446 = vld [vmem:[#allocation2 + $0x840] sm:$0xff]
    %v447 = vld [vmem:[#allocation2 + $0x848] sm:$0xff]
    %v448 = vld [vmem:[#allocation2 + $0x850] sm:$0xff]
    %v449 = vld [vmem:[#allocation2 + $0x858] sm:$0xff]
    %v450 = vld [vmem:[#allocation2 + $0x860] sm:$0xff]
    %v451 = vld [vmem:[#allocation2 + $0x868] sm:$0xff]
    %v452 = vld [vmem:[#allocation2 + $0x870] sm:$0xff]
    %v453 = vld [vmem:[#allocation2 + $0x878] sm:$0xff]
    %v454 = vld [vmem:[#allocation2 + $0x880] sm:$0xff]
    %v455 = vld [vmem:[#allocation2 + $0x888] sm:$0xff]
    %v456 = vld [vmem:[#allocation2 + $0x890] sm:$0xff]
    %v457 = vld [vmem:[#allocation2 + $0x898] sm:$0xff]
    %v458 = vld [vmem:[#allocation2 + $0x8a0] sm:$0xff]
    %v459 = vld [vmem:[#allocation2 + $0x8a8] sm:$0xff]
    %v460 = vld [vmem:[#allocation2 + $0x8b0] sm:$0xff]
    %v461 = vld [vmem:[#allocation2 + $0x8b8] sm:$0xff]
    %v462 = vld [vmem:[#allocation2 + $0x8c0] sm:$0xff]
    %v463 = vld [vmem:[#allocation2 + $0x8c8] sm:$0xff]
    %v464 = vld [vmem:[#allocation2 + $0x8d0] sm:$0xff]
    %v465 = vld [vmem:[#allocation2 + $0x8d8] sm:$0xff]
    %v466 = vld [vmem:[#allocation2 + $0x8e0] sm:$0xff]
    %v467 = vld [vmem:[#allocation2 + $0x8e8] sm:$0xff]
    %v468 = vld [vmem:[#allocation2 + $0x8f0] sm:$0xff]
    %v469 = vld [vmem:[#allocation2 + $0x8f8] sm:$0xff]
    %v470 = vld [vmem:[#allocation2 + $0x900] sm:$0xff]
    %v471 = vld [vmem:[#allocation2 + $0x908] sm:$0xff]
    %v472 = vld [vmem:[#allocation2 + $0x910] sm:$0xff]
    %v473 = vld [vmem:[#allocation2 + $0x918] sm:$0xff]
    %v474 = vld [vmem:[#allocation2 + $0x920] sm:$0xff]
    %v475 = vld [vmem:[#allocation2 + $0x928] sm:$0xff]
    %v476 = vld [vmem:[#allocation2 + $0x930] sm:$0xff]
    %v477 = vld [vmem:[#allocation2 + $0x938] sm:$0xff]
    %v478 = vld [vmem:[#allocation2 + $0x940] sm:$0xff]
    %v479 = vld [vmem:[#allocation2 + $0x948] sm:$0xff]
    %v480 = vld [vmem:[#allocation2 + $0x950] sm:$0xff]
    %v481 = vld [vmem:[#allocation2 + $0x958] sm:$0xff]
    %v482 = vld [vmem:[#allocation2 + $0x960] sm:$0xff]
    %v483 = vld [vmem:[#allocation2 + $0x968] sm:$0xff]
    %v484 = vld [vmem:[#allocation2 + $0x970] sm:$0xff]
    %v485 = vld [vmem:[#allocation2 + $0x978] sm:$0xff]
    %v486 = vld [vmem:[#allocation2 + $0x980] sm:$0xff]
    %v487 = vld [vmem:[#allocation2 + $0x988] sm:$0xff]
    %v488 = vld [vmem:[#allocation2 + $0x990] sm:$0xff]
    %v489 = vld [vmem:[#allocation2 + $0x998] sm:$0xff]
    %v490 = vld [vmem:[#allocation2 + $0x9a0] sm:$0xff]
    %v491 = vld [vmem:[#allocation2 + $0x9a8] sm:$0xff]
    %v492 = vld [vmem:[#allocation2 + $0x9b0] sm:$0xff]
    %v493 = vld [vmem:[#allocation2 + $0x9b8] sm:$0xff]
    %v494 = vld [vmem:[#allocation2 + $0x9c0] sm:$0xff]
    %v495 = vld [vmem:[#allocation2 + $0x9c8] sm:$0xff]
    %v496 = vld [vmem:[#allocation2 + $0x9d0] sm:$0xff]
    %v497 = vld [vmem:[#allocation2 + $0x9d8] sm:$0xff]
    %v498 = vld [vmem:[#allocation2 + $0x9e0] sm:$0xff]
    %v499 = vld [vmem:[#allocation2 + $0x9e8] sm:$0xff]
    %v500 = vld [vmem:[#allocation2 + $0x9f0] sm:$0xff]
    %v501 = vld [vmem:[#allocation2 + $0x9f8] sm:$0xff]
    %v502 = vld [vmem:[#allocation2 + $0xa00] sm:$0xff]
    %v503 = vld [vmem:[#allocation2 + $0xa08] sm:$0xff]
    %v504 = vld [vmem:[#allocation2 + $0xa10] sm:$0xff]
    %v505 = vld [vmem:[#allocation2 + $0xa18] sm:$0xff]
    %v506 = vld [vmem:[#allocation2 + $0xa20] sm:$0xff]
    %v507 = vld [vmem:[#allocation2 + $0xa28] sm:$0xff]
    %v508 = vld [vmem:[#allocation2 + $0xa30] sm:$0xff]
    %v509 = vld [vmem:[#allocation2 + $0xa38] sm:$0xff]
    %v510 = vld [vmem:[#allocation2 + $0xa40] sm:$0xff]
    %v511 = vld [vmem:[#allocation2 + $0xa48] sm:$0xff]
    %v512 = vld [vmem:[#allocation2 + $0xa50] sm:$0xff]
    %v513 = vld [vmem:[#allocation2 + $0xa58] sm:$0xff]
    %v514 = vld [vmem:[#allocation2 + $0xa60] sm:$0xff]
    %v515 = vld [vmem:[#allocation2 + $0xa68] sm:$0xff]
    %v516 = vld [vmem:[#allocation2 + $0xa70] sm:$0xff]
    %v517 = vld [vmem:[#allocation2 + $0xa78] sm:$0xff]
    %v518 = vld [vmem:[#allocation2 + $0xa80] sm:$0xff]
    %v519 = vld [vmem:[#allocation2 + $0xa88] sm:$0xff]
    %v520 = vld [vmem:[#allocation2 + $0xa90] sm:$0xff]
    %v521 = vld [vmem:[#allocation2 + $0xa98] sm:$0xff]
    %v522 = vld [vmem:[#allocation2 + $0xaa0] sm:$0xff]
    %v523 = vld [vmem:[#allocation2 + $0xaa8] sm:$0xff]
    %v524 = vld [vmem:[#allocation2 + $0xab0] sm:$0xff]
    %v525 = vld [vmem:[#allocation2 + $0xab8] sm:$0xff]
    %v526 = vld [vmem:[#allocation2 + $0xac0] sm:$0xff]
    %v527 = vld [vmem:[#allocation2 + $0xac8] sm:$0xff]
    %v528 = vld [vmem:[#allocation2 + $0xad0] sm:$0xff]
    %v529 = vld [vmem:[#allocation2 + $0xad8] sm:$0xff]
    %v530 = vld [vmem:[#allocation2 + $0xae0] sm:$0xff]
    %v531 = vld [vmem:[#allocation2 + $0xae8] sm:$0xff]
    %v532 = vld [vmem:[#allocation2 + $0xaf0] sm:$0xff]
    %v533 = vld [vmem:[#allocation2 + $0xaf8] sm:$0xff]
    %v534 = vld [vmem:[#allocation2 + $0xb00] sm:$0xff]
    %v535 = vld [vmem:[#allocation2 + $0xb08] sm:$0xff]
    %v536 = vld [vmem:[#allocation2 + $0xb10] sm:$0xff]
    %v537 = vld [vmem:[#allocation2 + $0xb18] sm:$0xff]
    %v538 = vld [vmem:[#allocation2 + $0xb20] sm:$0xff]
    %v539 = vld [vmem:[#allocation2 + $0xb28] sm:$0xff]
    %v540 = vld [vmem:[#allocation2 + $0xb30] sm:$0xff]
    %v541 = vld [vmem:[#allocation2 + $0xb38] sm:$0xff]
    %v542 = vld [vmem:[#allocation2 + $0xb40] sm:$0xff]
    %v543 = vld [vmem:[#allocation2 + $0xb48] sm:$0xff]
    %v544 = vld [vmem:[#allocation2 + $0xb50] sm:$0xff]
    %v545 = vld [vmem:[#allocation2 + $0xb58] sm:$0xff]
    %v546 = vld [vmem:[#allocation2 + $0xb60] sm:$0xff]
    %v547 = vld [vmem:[#allocation2 + $0xb68] sm:$0xff]
    %v548 = vld [vmem:[#allocation2 + $0xb70] sm:$0xff]
    %v549 = vld [vmem:[#allocation2 + $0xb78] sm:$0xff]
    %v550 = vld [vmem:[#allocation2 + $0xb80] sm:$0xff]
    %v551 = vld [vmem:[#allocation2 + $0xb88] sm:$0xff]
    %v552 = vld [vmem:[#allocation2 + $0xb90] sm:$0xff]
    %v553 = vld [vmem:[#allocation2 + $0xb98] sm:$0xff]
    %v554 = vld [vmem:[#allocation2 + $0xba0] sm:$0xff]
    %v555 = vld [vmem:[#allocation2 + $0xba8] sm:$0xff]
    %v556 = vld [vmem:[#allocation2 + $0xbb0] sm:$0xff]
    %v557 = vld [vmem:[#allocation2 + $0xbb8] sm:$0xff]
    %v558 = vld [vmem:[#allocation2 + $0xbc0] sm:$0xff]
    %v559 = vld [vmem:[#allocation2 + $0xbc8] sm:$0xff]
    %v560 = vld [vmem:[#allocation2 + $0xbd0] sm:$0xff]
    %v561 = vld [vmem:[#allocation2 + $0xbd8] sm:$0xff]
    %v562 = vld [vmem:[#allocation2 + $0xbe0] sm:$0xff]
    %v563 = vld [vmem:[#allocation2 + $0xbe8] sm:$0xff]
    %v564 = vld [vmem:[#allocation2 + $0xbf0] sm:$0xff]
    %v565 = vld [vmem:[#allocation2 + $0xbf8] sm:$0xff]
    %v566 = vld [vmem:[#allocation4] sm:$0x3]
    %v568 = vlaneseq
    %v569 = vshrl.u32 %v568, 7
    %v570 = vsub.s32 0, %v569
    %v571 = vrot.slane %v566, %v570
    %v572 = vlaneseq
    %v573 = vshrl.u32 %v572, 7
    %v574 = vsub.s32 1, %v573
    %v575 = vrot.slane %v566, %v574
    %v962 = vunpack.c.l.b16 %v182
    %v963 = vunpack.c.h.b16 %v182
    %v964 = vunpack.c.l.b16 %v183
    %v965 = vunpack.c.h.b16 %v183
    %v966 = vunpack.c.l.b16 %v184
    %v967 = vunpack.c.h.b16 %v184
    %v968 = vunpack.c.l.b16 %v185
    %v969 = vunpack.c.h.b16 %v185
    %v970 = vunpack.c.l.b16 %v186
    %v971 = vunpack.c.h.b16 %v186
    %v972 = vunpack.c.l.b16 %v187
    %v973 = vunpack.c.h.b16 %v187
    %v974 = vunpack.c.l.b16 %v188
    %v975 = vunpack.c.h.b16 %v188
    %v976 = vunpack.c.l.b16 %v189
    %v977 = vunpack.c.h.b16 %v189
    %v978 = vunpack.c.l.b16 %v190
    %v979 = vunpack.c.h.b16 %v190
    %v980 = vunpack.c.l.b16 %v191
    %v981 = vunpack.c.h.b16 %v191
    %v982 = vunpack.c.l.b16 %v192
    %v983 = vunpack.c.h.b16 %v192
    %v984 = vunpack.c.l.b16 %v193
    %v985 = vunpack.c.h.b16 %v193
    %v986 = vunpack.c.l.b16 %v194
    %v987 = vunpack.c.h.b16 %v194
    %v988 = vunpack.c.l.b16 %v195
    %v989 = vunpack.c.h.b16 %v195
    %v990 = vunpack.c.l.b16 %v196
    %v991 = vunpack.c.h.b16 %v196
    %v992 = vunpack.c.l.b16 %v197
    %v993 = vunpack.c.h.b16 %v197
    %v994 = vunpack.c.l.b16 %v198
    %v995 = vunpack.c.h.b16 %v198
    %v996 = vunpack.c.l.b16 %v199
    %v997 = vunpack.c.h.b16 %v199
    %v998 = vunpack.c.l.b16 %v200
    %v999 = vunpack.c.h.b16 %v200
    %v1000 = vunpack.c.l.b16 %v201
    %v1001 = vunpack.c.h.b16 %v201
    %v1002 = vunpack.c.l.b16 %v202
    %v1003 = vunpack.c.h.b16 %v202
    %v1004 = vunpack.c.l.b16 %v203
    %v1005 = vunpack.c.h.b16 %v203
    %v1006 = vunpack.c.l.b16 %v204
    %v1007 = vunpack.c.h.b16 %v204
    %v1008 = vunpack.c.l.b16 %v205
    %v1009 = vunpack.c.h.b16 %v205
    %v1010 = vunpack.c.l.b16 %v206
    %v1011 = vunpack.c.h.b16 %v206
    %v1012 = vunpack.c.l.b16 %v207
    %v1013 = vunpack.c.h.b16 %v207
    %v1014 = vunpack.c.l.b16 %v208
    %v1015 = vunpack.c.h.b16 %v208
    %v1016 = vunpack.c.l.b16 %v209
    %v1017 = vunpack.c.h.b16 %v209
    %v1018 = vunpack.c.l.b16 %v210
    %v1019 = vunpack.c.h.b16 %v210
    %v1020 = vunpack.c.l.b16 %v211
    %v1021 = vunpack.c.h.b16 %v211
    %v1022 = vunpack.c.l.b16 %v212
    %v1023 = vunpack.c.h.b16 %v212
    %v1024 = vunpack.c.l.b16 %v213
    %v1025 = vunpack.c.h.b16 %v213
    %v1026 = vunpack.c.l.b16 %v214
    %v1027 = vunpack.c.h.b16 %v214
    %v1028 = vunpack.c.l.b16 %v215
    %v1029 = vunpack.c.h.b16 %v215
    %v1030 = vunpack.c.l.b16 %v216
    %v1031 = vunpack.c.h.b16 %v216
    %v1032 = vunpack.c.l.b16 %v217
    %v1033 = vunpack.c.h.b16 %v217
    %v1034 = vunpack.c.l.b16 %v218
    %v1035 = vunpack.c.h.b16 %v218
    %v1036 = vunpack.c.l.b16 %v219
    %v1037 = vunpack.c.h.b16 %v219
    %v1038 = vunpack.c.l.b16 %v220
    %v1039 = vunpack.c.h.b16 %v220
    %v1040 = vunpack.c.l.b16 %v221
    %v1041 = vunpack.c.h.b16 %v221
    %v1042 = vunpack.c.l.b16 %v222
    %v1043 = vunpack.c.h.b16 %v222
    %v1044 = vunpack.c.l.b16 %v223
    %v1045 = vunpack.c.h.b16 %v223
    %v1046 = vunpack.c.l.b16 %v224
    %v1047 = vunpack.c.h.b16 %v224
    %v1048 = vunpack.c.l.b16 %v225
    %v1049 = vunpack.c.h.b16 %v225
    %v1050 = vunpack.c.l.b16 %v226
    %v1051 = vunpack.c.h.b16 %v226
    %v1052 = vunpack.c.l.b16 %v227
    %v1053 = vunpack.c.h.b16 %v227
    %v1054 = vunpack.c.l.b16 %v228
    %v1055 = vunpack.c.h.b16 %v228
    %v1056 = vunpack.c.l.b16 %v229
    %v1057 = vunpack.c.h.b16 %v229
    %v1058 = vunpack.c.l.b16 %v230
    %v1059 = vunpack.c.h.b16 %v230
    %v1060 = vunpack.c.l.b16 %v231
    %v1061 = vunpack.c.h.b16 %v231
    %v1062 = vunpack.c.l.b16 %v232
    %v1063 = vunpack.c.h.b16 %v232
    %v1064 = vunpack.c.l.b16 %v233
    %v1065 = vunpack.c.h.b16 %v233
    %v1066 = vunpack.c.l.b16 %v234
    %v1067 = vunpack.c.h.b16 %v234
    %v1068 = vunpack.c.l.b16 %v235
    %v1069 = vunpack.c.h.b16 %v235
    %v1070 = vunpack.c.l.b16 %v236
    %v1071 = vunpack.c.h.b16 %v236
    %v1072 = vunpack.c.l.b16 %v237
    %v1073 = vunpack.c.h.b16 %v237
    %v1074 = vunpack.c.l.b16 %v238
    %v1075 = vunpack.c.h.b16 %v238
    %v1076 = vunpack.c.l.b16 %v239
    %v1077 = vunpack.c.h.b16 %v239
    %v1078 = vunpack.c.l.b16 %v240
    %v1079 = vunpack.c.h.b16 %v240
    %v1080 = vunpack.c.l.b16 %v241
    %v1081 = vunpack.c.h.b16 %v241
    %v1082 = vunpack.c.l.b16 %v242
    %v1083 = vunpack.c.h.b16 %v242
    %v1084 = vunpack.c.l.b16 %v243
    %v1085 = vunpack.c.h.b16 %v243
    %v1086 = vunpack.c.l.b16 %v244
    %v1087 = vunpack.c.h.b16 %v244
    %v1088 = vunpack.c.l.b16 %v245
    %v1089 = vunpack.c.h.b16 %v245
    %v1090 = vunpack.c.l.b16 %v246
    %v1091 = vunpack.c.h.b16 %v246
    %v1092 = vunpack.c.l.b16 %v247
    %v1093 = vunpack.c.h.b16 %v247
    %v1094 = vunpack.c.l.b16 %v248
    %v1095 = vunpack.c.h.b16 %v248
    %v1096 = vunpack.c.l.b16 %v249
    %v1097 = vunpack.c.h.b16 %v249
    %v1098 = vunpack.c.l.b16 %v250
    %v1099 = vunpack.c.h.b16 %v250
    %v1100 = vunpack.c.l.b16 %v251
    %v1101 = vunpack.c.h.b16 %v251
    %v1102 = vunpack.c.l.b16 %v252
    %v1103 = vunpack.c.h.b16 %v252
    %v1104 = vunpack.c.l.b16 %v253
    %v1105 = vunpack.c.h.b16 %v253
    %v1106 = vunpack.c.l.b16 %v254
    %v1107 = vunpack.c.h.b16 %v254
    %v1108 = vunpack.c.l.b16 %v255
    %v1109 = vunpack.c.h.b16 %v255
    %v1110 = vunpack.c.l.b16 %v256
    %v1111 = vunpack.c.h.b16 %v256
    %v1112 = vunpack.c.l.b16 %v257
    %v1113 = vunpack.c.h.b16 %v257
    %v1114 = vunpack.c.l.b16 %v258
    %v1115 = vunpack.c.h.b16 %v258
    %v1116 = vunpack.c.l.b16 %v259
    %v1117 = vunpack.c.h.b16 %v259
    %v1118 = vunpack.c.l.b16 %v260
    %v1119 = vunpack.c.h.b16 %v260
    %v1120 = vunpack.c.l.b16 %v261
    %v1121 = vunpack.c.h.b16 %v261
    %v1122 = vunpack.c.l.b16 %v262
    %v1123 = vunpack.c.h.b16 %v262
    %v1124 = vunpack.c.l.b16 %v263
    %v1125 = vunpack.c.h.b16 %v263
    %v1126 = vunpack.c.l.b16 %v264
    %v1127 = vunpack.c.h.b16 %v264
    %v1128 = vunpack.c.l.b16 %v265
    %v1129 = vunpack.c.h.b16 %v265
    %v1130 = vunpack.c.l.b16 %v266
    %v1131 = vunpack.c.h.b16 %v266
    %v1132 = vunpack.c.l.b16 %v267
    %v1133 = vunpack.c.h.b16 %v267
    %v1134 = vunpack.c.l.b16 %v268
    %v1135 = vunpack.c.h.b16 %v268
    %v1136 = vunpack.c.l.b16 %v269
    %v1137 = vunpack.c.h.b16 %v269
    %v1138 = vunpack.c.l.b16 %v270
    %v1139 = vunpack.c.h.b16 %v270
    %v1140 = vunpack.c.l.b16 %v271
    %v1141 = vunpack.c.h.b16 %v271
    %v1142 = vunpack.c.l.b16 %v272
    %v1143 = vunpack.c.h.b16 %v272
    %v1144 = vunpack.c.l.b16 %v273
    %v1145 = vunpack.c.h.b16 %v273
    %v1146 = vunpack.c.l.b16 %v274
    %v1147 = vunpack.c.h.b16 %v274
    %v1148 = vunpack.c.l.b16 %v275
    %v1149 = vunpack.c.h.b16 %v275
    %v1150 = vunpack.c.l.b16 %v276
    %v1151 = vunpack.c.h.b16 %v276
    %v1152 = vunpack.c.l.b16 %v277
    %v1153 = vunpack.c.h.b16 %v277
    %v1154 = vunpack.c.l.b16 %v278
    %v1155 = vunpack.c.h.b16 %v278
    %v1156 = vunpack.c.l.b16 %v279
    %v1157 = vunpack.c.h.b16 %v279
    %v1158 = vunpack.c.l.b16 %v280
    %v1159 = vunpack.c.h.b16 %v280
    %v1160 = vunpack.c.l.b16 %v281
    %v1161 = vunpack.c.h.b16 %v281
    %v1162 = vunpack.c.l.b16 %v282
    %v1163 = vunpack.c.h.b16 %v282
    %v1164 = vunpack.c.l.b16 %v283
    %v1165 = vunpack.c.h.b16 %v283
    %v1166 = vunpack.c.l.b16 %v284
    %v1167 = vunpack.c.h.b16 %v284
    %v1168 = vunpack.c.l.b16 %v285
    %v1169 = vunpack.c.h.b16 %v285
    %v1170 = vunpack.c.l.b16 %v286
    %v1171 = vunpack.c.h.b16 %v286
    %v1172 = vunpack.c.l.b16 %v287
    %v1173 = vunpack.c.h.b16 %v287
    %v1174 = vunpack.c.l.b16 %v288
    %v1175 = vunpack.c.h.b16 %v288
    %v1176 = vunpack.c.l.b16 %v289
    %v1177 = vunpack.c.h.b16 %v289
    %v1178 = vunpack.c.l.b16 %v290
    %v1179 = vunpack.c.h.b16 %v290
    %v1180 = vunpack.c.l.b16 %v291
    %v1181 = vunpack.c.h.b16 %v291
    %v1182 = vunpack.c.l.b16 %v292
    %v1183 = vunpack.c.h.b16 %v292
    %v1184 = vunpack.c.l.b16 %v293
    %v1185 = vunpack.c.h.b16 %v293
    %v1186 = vunpack.c.l.b16 %v294
    %v1187 = vunpack.c.h.b16 %v294
    %v1188 = vunpack.c.l.b16 %v295
    %v1189 = vunpack.c.h.b16 %v295
    %v1190 = vunpack.c.l.b16 %v296
    %v1191 = vunpack.c.h.b16 %v296
    %v1192 = vunpack.c.l.b16 %v297
    %v1193 = vunpack.c.h.b16 %v297
    %v1194 = vunpack.c.l.b16 %v298
    %v1195 = vunpack.c.h.b16 %v298
    %v1196 = vunpack.c.l.b16 %v299
    %v1197 = vunpack.c.h.b16 %v299
    %v1198 = vunpack.c.l.b16 %v300
    %v1199 = vunpack.c.h.b16 %v300
    %v1200 = vunpack.c.l.b16 %v301
    %v1201 = vunpack.c.h.b16 %v301
    %v1202 = vunpack.c.l.b16 %v302
    %v1203 = vunpack.c.h.b16 %v302
    %v1204 = vunpack.c.l.b16 %v303
    %v1205 = vunpack.c.h.b16 %v303
    %v1206 = vunpack.c.l.b16 %v304
    %v1207 = vunpack.c.h.b16 %v304
    %v1208 = vunpack.c.l.b16 %v305
    %v1209 = vunpack.c.h.b16 %v305
    %v1210 = vunpack.c.l.b16 %v306
    %v1211 = vunpack.c.h.b16 %v306
    %v1212 = vunpack.c.l.b16 %v307
    %v1213 = vunpack.c.h.b16 %v307
    %v1214 = vunpack.c.l.b16 %v308
    %v1215 = vunpack.c.h.b16 %v308
    %v1216 = vunpack.c.l.b16 %v309
    %v1217 = vunpack.c.h.b16 %v309
    %v1218 = vunpack.c.l.b16 %v310
    %v1219 = vunpack.c.h.b16 %v310
    %v1220 = vunpack.c.l.b16 %v311
    %v1221 = vunpack.c.h.b16 %v311
    %v1222 = vunpack.c.l.b16 %v312
    %v1223 = vunpack.c.h.b16 %v312
    %v1224 = vunpack.c.l.b16 %v313
    %v1225 = vunpack.c.h.b16 %v313
    %v1226 = vunpack.c.l.b16 %v314
    %v1227 = vunpack.c.h.b16 %v314
    %v1228 = vunpack.c.l.b16 %v315
    %v1229 = vunpack.c.h.b16 %v315
    %v1230 = vunpack.c.l.b16 %v316
    %v1231 = vunpack.c.h.b16 %v316
    %v1232 = vunpack.c.l.b16 %v317
    %v1233 = vunpack.c.h.b16 %v317
    %v1234 = vunpack.c.l.b16 %v318
    %v1235 = vunpack.c.h.b16 %v318
    %v1236 = vunpack.c.l.b16 %v319
    %v1237 = vunpack.c.h.b16 %v319
    %v1238 = vunpack.c.l.b16 %v320
    %v1239 = vunpack.c.h.b16 %v320
    %v1240 = vunpack.c.l.b16 %v321
    %v1241 = vunpack.c.h.b16 %v321
    %v1242 = vunpack.c.l.b16 %v322
    %v1243 = vunpack.c.h.b16 %v322
    %v1244 = vunpack.c.l.b16 %v323
    %v1245 = vunpack.c.h.b16 %v323
    %v1246 = vunpack.c.l.b16 %v324
    %v1247 = vunpack.c.h.b16 %v324
    %v1248 = vunpack.c.l.b16 %v325
    %v1249 = vunpack.c.h.b16 %v325
    %v1250 = vunpack.c.l.b16 %v326
    %v1251 = vunpack.c.h.b16 %v326
    %v1252 = vunpack.c.l.b16 %v327
    %v1253 = vunpack.c.h.b16 %v327
    %v1254 = vunpack.c.l.b16 %v328
    %v1255 = vunpack.c.h.b16 %v328
    %v1256 = vunpack.c.l.b16 %v329
    %v1257 = vunpack.c.h.b16 %v329
    %v1258 = vunpack.c.l.b16 %v330
    %v1259 = vunpack.c.h.b16 %v330
    %v1260 = vunpack.c.l.b16 %v331
    %v1261 = vunpack.c.h.b16 %v331
    %v1262 = vunpack.c.l.b16 %v332
    %v1263 = vunpack.c.h.b16 %v332
    %v1264 = vunpack.c.l.b16 %v333
    %v1265 = vunpack.c.h.b16 %v333
    %v1266 = vunpack.c.l.b16 %v334
    %v1267 = vunpack.c.h.b16 %v334
    %v1268 = vunpack.c.l.b16 %v335
    %v1269 = vunpack.c.h.b16 %v335
    %v1270 = vunpack.c.l.b16 %v336
    %v1271 = vunpack.c.h.b16 %v336
    %v1272 = vunpack.c.l.b16 %v337
    %v1273 = vunpack.c.h.b16 %v337
    %v1274 = vunpack.c.l.b16 %v338
    %v1275 = vunpack.c.h.b16 %v338
    %v1276 = vunpack.c.l.b16 %v339
    %v1277 = vunpack.c.h.b16 %v339
    %v1278 = vunpack.c.l.b16 %v340
    %v1279 = vunpack.c.h.b16 %v340
    %v1280 = vunpack.c.l.b16 %v341
    %v1281 = vunpack.c.h.b16 %v341
    %v1282 = vunpack.c.l.b16 %v342
    %v1283 = vunpack.c.h.b16 %v342
    %v1284 = vunpack.c.l.b16 %v343
    %v1285 = vunpack.c.h.b16 %v343
    %v1286 = vunpack.c.l.b16 %v344
    %v1287 = vunpack.c.h.b16 %v344
    %v1288 = vunpack.c.l.b16 %v345
    %v1289 = vunpack.c.h.b16 %v345
    %v1290 = vunpack.c.l.b16 %v346
    %v1291 = vunpack.c.h.b16 %v346
    %v1292 = vunpack.c.l.b16 %v347
    %v1293 = vunpack.c.h.b16 %v347
    %v1294 = vunpack.c.l.b16 %v348
    %v1295 = vunpack.c.h.b16 %v348
    %v1296 = vunpack.c.l.b16 %v349
    %v1297 = vunpack.c.h.b16 %v349
    %v1298 = vunpack.c.l.b16 %v350
    %v1299 = vunpack.c.h.b16 %v350
    %v1300 = vunpack.c.l.b16 %v351
    %v1301 = vunpack.c.h.b16 %v351
    %v1302 = vunpack.c.l.b16 %v352
    %v1303 = vunpack.c.h.b16 %v352
    %v1304 = vunpack.c.l.b16 %v353
    %v1305 = vunpack.c.h.b16 %v353
    %v1306 = vunpack.c.l.b16 %v354
    %v1307 = vunpack.c.h.b16 %v354
    %v1308 = vunpack.c.l.b16 %v355
    %v1309 = vunpack.c.h.b16 %v355
    %v1310 = vunpack.c.l.b16 %v356
    %v1311 = vunpack.c.h.b16 %v356
    %v1312 = vunpack.c.l.b16 %v357
    %v1313 = vunpack.c.h.b16 %v357
    %v1314 = vunpack.c.l.b16 %v358
    %v1315 = vunpack.c.h.b16 %v358
    %v1316 = vunpack.c.l.b16 %v359
    %v1317 = vunpack.c.h.b16 %v359
    %v1318 = vunpack.c.l.b16 %v360
    %v1319 = vunpack.c.h.b16 %v360
    %v1320 = vunpack.c.l.b16 %v361
    %v1321 = vunpack.c.h.b16 %v361
    %v1322 = vunpack.c.l.b16 %v362
    %v1323 = vunpack.c.h.b16 %v362
    %v1324 = vunpack.c.l.b16 %v363
    %v1325 = vunpack.c.h.b16 %v363
    %v1326 = vunpack.c.l.b16 %v364
    %v1327 = vunpack.c.h.b16 %v364
    %v1328 = vunpack.c.l.b16 %v365
    %v1329 = vunpack.c.h.b16 %v365
    %v1330 = vunpack.c.l.b16 %v366
    %v1331 = vunpack.c.h.b16 %v366
    %v1332 = vunpack.c.l.b16 %v367
    %v1333 = vunpack.c.h.b16 %v367
    %v1334 = vunpack.c.l.b16 %v368
    %v1335 = vunpack.c.h.b16 %v368
    %v1336 = vunpack.c.l.b16 %v369
    %v1337 = vunpack.c.h.b16 %v369
    %v1338 = vunpack.c.l.b16 %v370
    %v1339 = vunpack.c.h.b16 %v370
    %v1340 = vunpack.c.l.b16 %v371
    %v1341 = vunpack.c.h.b16 %v371
    %v1342 = vunpack.c.l.b16 %v372
    %v1343 = vunpack.c.h.b16 %v372
    %v1344 = vunpack.c.l.b16 %v373
    %v1345 = vunpack.c.h.b16 %v373
    %v1346 = vunpack.c.l.b16 %v374
    %v1347 = vunpack.c.h.b16 %v374
    %v1348 = vunpack.c.l.b16 %v375
    %v1349 = vunpack.c.h.b16 %v375
    %v1350 = vunpack.c.l.b16 %v376
    %v1351 = vunpack.c.h.b16 %v376
    %v1352 = vunpack.c.l.b16 %v377
    %v1353 = vunpack.c.h.b16 %v377
    %v1354 = vunpack.c.l.b16 %v378
    %v1355 = vunpack.c.h.b16 %v378
    %v1356 = vunpack.c.l.b16 %v379
    %v1357 = vunpack.c.h.b16 %v379
    %v1358 = vunpack.c.l.b16 %v380
    %v1359 = vunpack.c.h.b16 %v380
    %v1360 = vunpack.c.l.b16 %v381
    %v1361 = vunpack.c.h.b16 %v381
    %v1362 = vunpack.c.l.b16 %v382
    %v1363 = vunpack.c.h.b16 %v382
    %v1364 = vunpack.c.l.b16 %v383
    %v1365 = vunpack.c.h.b16 %v383
    %v1366 = vunpack.c.l.b16 %v384
    %v1367 = vunpack.c.h.b16 %v384
    %v1368 = vunpack.c.l.b16 %v385
    %v1369 = vunpack.c.h.b16 %v385
    %v1370 = vunpack.c.l.b16 %v386
    %v1371 = vunpack.c.h.b16 %v386
    %v1372 = vunpack.c.l.b16 %v387
    %v1373 = vunpack.c.h.b16 %v387
    %v1374 = vunpack.c.l.b16 %v388
    %v1375 = vunpack.c.h.b16 %v388
    %v1376 = vunpack.c.l.b16 %v389
    %v1377 = vunpack.c.h.b16 %v389
    %v1378 = vunpack.c.l.b16 %v390
    %v1379 = vunpack.c.h.b16 %v390
    %v1380 = vunpack.c.l.b16 %v391
    %v1381 = vunpack.c.h.b16 %v391
    %v1382 = vunpack.c.l.b16 %v392
    %v1383 = vunpack.c.h.b16 %v392
    %v1384 = vunpack.c.l.b16 %v393
    %v1385 = vunpack.c.h.b16 %v393
    %v1386 = vunpack.c.l.b16 %v394
    %v1387 = vunpack.c.h.b16 %v394
    %v1388 = vunpack.c.l.b16 %v395
    %v1389 = vunpack.c.h.b16 %v395
    %v1390 = vunpack.c.l.b16 %v396
    %v1391 = vunpack.c.h.b16 %v396
    %v1392 = vunpack.c.l.b16 %v397
    %v1393 = vunpack.c.h.b16 %v397
    %v1394 = vunpack.c.l.b16 %v398
    %v1395 = vunpack.c.h.b16 %v398
    %v1396 = vunpack.c.l.b16 %v399
    %v1397 = vunpack.c.h.b16 %v399
    %v1398 = vunpack.c.l.b16 %v400
    %v1399 = vunpack.c.h.b16 %v400
    %v1400 = vunpack.c.l.b16 %v401
    %v1401 = vunpack.c.h.b16 %v401
    %v1402 = vunpack.c.l.b16 %v402
    %v1403 = vunpack.c.h.b16 %v402
    %v1404 = vunpack.c.l.b16 %v403
    %v1405 = vunpack.c.h.b16 %v403
    %v1406 = vunpack.c.l.b16 %v404
    %v1407 = vunpack.c.h.b16 %v404
    %v1408 = vunpack.c.l.b16 %v405
    %v1409 = vunpack.c.h.b16 %v405
    %v1410 = vunpack.c.l.b16 %v406
    %v1411 = vunpack.c.h.b16 %v406
    %v1412 = vunpack.c.l.b16 %v407
    %v1413 = vunpack.c.h.b16 %v407
    %v1414 = vunpack.c.l.b16 %v408
    %v1415 = vunpack.c.h.b16 %v408
    %v1416 = vunpack.c.l.b16 %v409
    %v1417 = vunpack.c.h.b16 %v409
    %v1418 = vunpack.c.l.b16 %v410
    %v1419 = vunpack.c.h.b16 %v410
    %v1420 = vunpack.c.l.b16 %v411
    %v1421 = vunpack.c.h.b16 %v411
    %v1422 = vunpack.c.l.b16 %v412
    %v1423 = vunpack.c.h.b16 %v412
    %v1424 = vunpack.c.l.b16 %v413
    %v1425 = vunpack.c.h.b16 %v413
    %v1426 = vunpack.c.l.b16 %v414
    %v1427 = vunpack.c.h.b16 %v414
    %v1428 = vunpack.c.l.b16 %v415
    %v1429 = vunpack.c.h.b16 %v415
    %v1430 = vunpack.c.l.b16 %v416
    %v1431 = vunpack.c.h.b16 %v416
    %v1432 = vunpack.c.l.b16 %v417
    %v1433 = vunpack.c.h.b16 %v417
    %v1434 = vunpack.c.l.b16 %v418
    %v1435 = vunpack.c.h.b16 %v418
    %v1436 = vunpack.c.l.b16 %v419
    %v1437 = vunpack.c.h.b16 %v419
    %v1438 = vunpack.c.l.b16 %v420
    %v1439 = vunpack.c.h.b16 %v420
    %v1440 = vunpack.c.l.b16 %v421
    %v1441 = vunpack.c.h.b16 %v421
    %v1442 = vunpack.c.l.b16 %v422
    %v1443 = vunpack.c.h.b16 %v422
    %v1444 = vunpack.c.l.b16 %v423
    %v1445 = vunpack.c.h.b16 %v423
    %v1446 = vunpack.c.l.b16 %v424
    %v1447 = vunpack.c.h.b16 %v424
    %v1448 = vunpack.c.l.b16 %v425
    %v1449 = vunpack.c.h.b16 %v425
    %v1450 = vunpack.c.l.b16 %v426
    %v1451 = vunpack.c.h.b16 %v426
    %v1452 = vunpack.c.l.b16 %v427
    %v1453 = vunpack.c.h.b16 %v427
    %v1454 = vunpack.c.l.b16 %v428
    %v1455 = vunpack.c.h.b16 %v428
    %v1456 = vunpack.c.l.b16 %v429
    %v1457 = vunpack.c.h.b16 %v429
    %v1458 = vunpack.c.l.b16 %v430
    %v1459 = vunpack.c.h.b16 %v430
    %v1460 = vunpack.c.l.b16 %v431
    %v1461 = vunpack.c.h.b16 %v431
    %v1462 = vunpack.c.l.b16 %v432
    %v1463 = vunpack.c.h.b16 %v432
    %v1464 = vunpack.c.l.b16 %v433
    %v1465 = vunpack.c.h.b16 %v433
    %v1466 = vunpack.c.l.b16 %v434
    %v1467 = vunpack.c.h.b16 %v434
    %v1468 = vunpack.c.l.b16 %v435
    %v1469 = vunpack.c.h.b16 %v435
    %v1470 = vunpack.c.l.b16 %v436
    %v1471 = vunpack.c.h.b16 %v436
    %v1472 = vunpack.c.l.b16 %v437
    %v1473 = vunpack.c.h.b16 %v437
    %v1474 = vunpack.c.l.b16 %v438
    %v1475 = vunpack.c.h.b16 %v438
    %v1476 = vunpack.c.l.b16 %v439
    %v1477 = vunpack.c.h.b16 %v439
    %v1478 = vunpack.c.l.b16 %v440
    %v1479 = vunpack.c.h.b16 %v440
    %v1480 = vunpack.c.l.b16 %v441
    %v1481 = vunpack.c.h.b16 %v441
    %v1482 = vunpack.c.l.b16 %v442
    %v1483 = vunpack.c.h.b16 %v442
    %v1484 = vunpack.c.l.b16 %v443
    %v1485 = vunpack.c.h.b16 %v443
    %v1486 = vunpack.c.l.b16 %v444
    %v1487 = vunpack.c.h.b16 %v444
    %v1488 = vunpack.c.l.b16 %v445
    %v1489 = vunpack.c.h.b16 %v445
    %v1490 = vunpack.c.l.b16 %v446
    %v1491 = vunpack.c.h.b16 %v446
    %v1492 = vunpack.c.l.b16 %v447
    %v1493 = vunpack.c.h.b16 %v447
    %v1494 = vunpack.c.l.b16 %v448
    %v1495 = vunpack.c.h.b16 %v448
    %v1496 = vunpack.c.l.b16 %v449
    %v1497 = vunpack.c.h.b16 %v449
    %v1498 = vunpack.c.l.b16 %v450
    %v1499 = vunpack.c.h.b16 %v450
    %v1500 = vunpack.c.l.b16 %v451
    %v1501 = vunpack.c.h.b16 %v451
    %v1502 = vunpack.c.l.b16 %v452
    %v1503 = vunpack.c.h.b16 %v452
    %v1504 = vunpack.c.l.b16 %v453
    %v1505 = vunpack.c.h.b16 %v453
    %v1506 = vunpack.c.l.b16 %v454
    %v1507 = vunpack.c.h.b16 %v454
    %v1508 = vunpack.c.l.b16 %v455
    %v1509 = vunpack.c.h.b16 %v455
    %v1510 = vunpack.c.l.b16 %v456
    %v1511 = vunpack.c.h.b16 %v456
    %v1512 = vunpack.c.l.b16 %v457
    %v1513 = vunpack.c.h.b16 %v457
    %v1514 = vunpack.c.l.b16 %v458
    %v1515 = vunpack.c.h.b16 %v458
    %v1516 = vunpack.c.l.b16 %v459
    %v1517 = vunpack.c.h.b16 %v459
    %v1518 = vunpack.c.l.b16 %v460
    %v1519 = vunpack.c.h.b16 %v460
    %v1520 = vunpack.c.l.b16 %v461
    %v1521 = vunpack.c.h.b16 %v461
    %v1522 = vunpack.c.l.b16 %v462
    %v1523 = vunpack.c.h.b16 %v462
    %v1524 = vunpack.c.l.b16 %v463
    %v1525 = vunpack.c.h.b16 %v463
    %v1526 = vunpack.c.l.b16 %v464
    %v1527 = vunpack.c.h.b16 %v464
    %v1528 = vunpack.c.l.b16 %v465
    %v1529 = vunpack.c.h.b16 %v465
    %v1530 = vunpack.c.l.b16 %v466
    %v1531 = vunpack.c.h.b16 %v466
    %v1532 = vunpack.c.l.b16 %v467
    %v1533 = vunpack.c.h.b16 %v467
    %v1534 = vunpack.c.l.b16 %v468
    %v1535 = vunpack.c.h.b16 %v468
    %v1536 = vunpack.c.l.b16 %v469
    %v1537 = vunpack.c.h.b16 %v469
    %v1538 = vunpack.c.l.b16 %v470
    %v1539 = vunpack.c.h.b16 %v470
    %v1540 = vunpack.c.l.b16 %v471
    %v1541 = vunpack.c.h.b16 %v471
    %v1542 = vunpack.c.l.b16 %v472
    %v1543 = vunpack.c.h.b16 %v472
    %v1544 = vunpack.c.l.b16 %v473
    %v1545 = vunpack.c.h.b16 %v473
    %v1546 = vunpack.c.l.b16 %v474
    %v1547 = vunpack.c.h.b16 %v474
    %v1548 = vunpack.c.l.b16 %v475
    %v1549 = vunpack.c.h.b16 %v475
    %v1550 = vunpack.c.l.b16 %v476
    %v1551 = vunpack.c.h.b16 %v476
    %v1552 = vunpack.c.l.b16 %v477
    %v1553 = vunpack.c.h.b16 %v477
    %v1554 = vunpack.c.l.b16 %v478
    %v1555 = vunpack.c.h.b16 %v478
    %v1556 = vunpack.c.l.b16 %v479
    %v1557 = vunpack.c.h.b16 %v479
    %v1558 = vunpack.c.l.b16 %v480
    %v1559 = vunpack.c.h.b16 %v480
    %v1560 = vunpack.c.l.b16 %v481
    %v1561 = vunpack.c.h.b16 %v481
    %v1562 = vunpack.c.l.b16 %v482
    %v1563 = vunpack.c.h.b16 %v482
    %v1564 = vunpack.c.l.b16 %v483
    %v1565 = vunpack.c.h.b16 %v483
    %v1566 = vunpack.c.l.b16 %v484
    %v1567 = vunpack.c.h.b16 %v484
    %v1568 = vunpack.c.l.b16 %v485
    %v1569 = vunpack.c.h.b16 %v485
    %v1570 = vunpack.c.l.b16 %v486
    %v1571 = vunpack.c.h.b16 %v486
    %v1572 = vunpack.c.l.b16 %v487
    %v1573 = vunpack.c.h.b16 %v487
    %v1574 = vunpack.c.l.b16 %v488
    %v1575 = vunpack.c.h.b16 %v488
    %v1576 = vunpack.c.l.b16 %v489
    %v1577 = vunpack.c.h.b16 %v489
    %v1578 = vunpack.c.l.b16 %v490
    %v1579 = vunpack.c.h.b16 %v490
    %v1580 = vunpack.c.l.b16 %v491
    %v1581 = vunpack.c.h.b16 %v491
    %v1582 = vunpack.c.l.b16 %v492
    %v1583 = vunpack.c.h.b16 %v492
    %v1584 = vunpack.c.l.b16 %v493
    %v1585 = vunpack.c.h.b16 %v493
    %v1586 = vunpack.c.l.b16 %v494
    %v1587 = vunpack.c.h.b16 %v494
    %v1588 = vunpack.c.l.b16 %v495
    %v1589 = vunpack.c.h.b16 %v495
    %v1590 = vunpack.c.l.b16 %v496
    %v1591 = vunpack.c.h.b16 %v496
    %v1592 = vunpack.c.l.b16 %v497
    %v1593 = vunpack.c.h.b16 %v497
    %v1594 = vunpack.c.l.b16 %v498
    %v1595 = vunpack.c.h.b16 %v498
    %v1596 = vunpack.c.l.b16 %v499
    %v1597 = vunpack.c.h.b16 %v499
    %v1598 = vunpack.c.l.b16 %v500
    %v1599 = vunpack.c.h.b16 %v500
    %v1600 = vunpack.c.l.b16 %v501
    %v1601 = vunpack.c.h.b16 %v501
    %v1602 = vunpack.c.l.b16 %v502
    %v1603 = vunpack.c.h.b16 %v502
    %v1604 = vunpack.c.l.b16 %v503
    %v1605 = vunpack.c.h.b16 %v503
    %v1606 = vunpack.c.l.b16 %v504
    %v1607 = vunpack.c.h.b16 %v504
    %v1608 = vunpack.c.l.b16 %v505
    %v1609 = vunpack.c.h.b16 %v505
    %v1610 = vunpack.c.l.b16 %v506
    %v1611 = vunpack.c.h.b16 %v506
    %v1612 = vunpack.c.l.b16 %v507
    %v1613 = vunpack.c.h.b16 %v507
    %v1614 = vunpack.c.l.b16 %v508
    %v1615 = vunpack.c.h.b16 %v508
    %v1616 = vunpack.c.l.b16 %v509
    %v1617 = vunpack.c.h.b16 %v509
    %v1618 = vunpack.c.l.b16 %v510
    %v1619 = vunpack.c.h.b16 %v510
    %v1620 = vunpack.c.l.b16 %v511
    %v1621 = vunpack.c.h.b16 %v511
    %v1622 = vunpack.c.l.b16 %v512
    %v1623 = vunpack.c.h.b16 %v512
    %v1624 = vunpack.c.l.b16 %v513
    %v1625 = vunpack.c.h.b16 %v513
    %v1626 = vunpack.c.l.b16 %v514
    %v1627 = vunpack.c.h.b16 %v514
    %v1628 = vunpack.c.l.b16 %v515
    %v1629 = vunpack.c.h.b16 %v515
    %v1630 = vunpack.c.l.b16 %v516
    %v1631 = vunpack.c.h.b16 %v516
    %v1632 = vunpack.c.l.b16 %v517
    %v1633 = vunpack.c.h.b16 %v517
    %v1634 = vunpack.c.l.b16 %v518
    %v1635 = vunpack.c.h.b16 %v518
    %v1636 = vunpack.c.l.b16 %v519
    %v1637 = vunpack.c.h.b16 %v519
    %v1638 = vunpack.c.l.b16 %v520
    %v1639 = vunpack.c.h.b16 %v520
    %v1640 = vunpack.c.l.b16 %v521
    %v1641 = vunpack.c.h.b16 %v521
    %v1642 = vunpack.c.l.b16 %v522
    %v1643 = vunpack.c.h.b16 %v522
    %v1644 = vunpack.c.l.b16 %v523
    %v1645 = vunpack.c.h.b16 %v523
    %v1646 = vunpack.c.l.b16 %v524
    %v1647 = vunpack.c.h.b16 %v524
    %v1648 = vunpack.c.l.b16 %v525
    %v1649 = vunpack.c.h.b16 %v525
    %v1650 = vunpack.c.l.b16 %v526
    %v1651 = vunpack.c.h.b16 %v526
    %v1652 = vunpack.c.l.b16 %v527
    %v1653 = vunpack.c.h.b16 %v527
    %v1654 = vunpack.c.l.b16 %v528
    %v1655 = vunpack.c.h.b16 %v528
    %v1656 = vunpack.c.l.b16 %v529
    %v1657 = vunpack.c.h.b16 %v529
    %v1658 = vunpack.c.l.b16 %v530
    %v1659 = vunpack.c.h.b16 %v530
    %v1660 = vunpack.c.l.b16 %v531
    %v1661 = vunpack.c.h.b16 %v531
    %v1662 = vunpack.c.l.b16 %v532
    %v1663 = vunpack.c.h.b16 %v532
    %v1664 = vunpack.c.l.b16 %v533
    %v1665 = vunpack.c.h.b16 %v533
    %v1666 = vunpack.c.l.b16 %v534
    %v1667 = vunpack.c.h.b16 %v534
    %v1668 = vunpack.c.l.b16 %v535
    %v1669 = vunpack.c.h.b16 %v535
    %v1670 = vunpack.c.l.b16 %v536
    %v1671 = vunpack.c.h.b16 %v536
    %v1672 = vunpack.c.l.b16 %v537
    %v1673 = vunpack.c.h.b16 %v537
    %v1674 = vunpack.c.l.b16 %v538
    %v1675 = vunpack.c.h.b16 %v538
    %v1676 = vunpack.c.l.b16 %v539
    %v1677 = vunpack.c.h.b16 %v539
    %v1678 = vunpack.c.l.b16 %v540
    %v1679 = vunpack.c.h.b16 %v540
    %v1680 = vunpack.c.l.b16 %v541
    %v1681 = vunpack.c.h.b16 %v541
    %v1682 = vunpack.c.l.b16 %v542
    %v1683 = vunpack.c.h.b16 %v542
    %v1684 = vunpack.c.l.b16 %v543
    %v1685 = vunpack.c.h.b16 %v543
    %v1686 = vunpack.c.l.b16 %v544
    %v1687 = vunpack.c.h.b16 %v544
    %v1688 = vunpack.c.l.b16 %v545
    %v1689 = vunpack.c.h.b16 %v545
    %v1690 = vunpack.c.l.b16 %v546
    %v1691 = vunpack.c.h.b16 %v546
    %v1692 = vunpack.c.l.b16 %v547
    %v1693 = vunpack.c.h.b16 %v547
    %v1694 = vunpack.c.l.b16 %v548
    %v1695 = vunpack.c.h.b16 %v548
    %v1696 = vunpack.c.l.b16 %v549
    %v1697 = vunpack.c.h.b16 %v549
    %v1698 = vunpack.c.l.b16 %v550
    %v1699 = vunpack.c.h.b16 %v550
    %v1700 = vunpack.c.l.b16 %v551
    %v1701 = vunpack.c.h.b16 %v551
    %v1702 = vunpack.c.l.b16 %v552
    %v1703 = vunpack.c.h.b16 %v552
    %v1704 = vunpack.c.l.b16 %v553
    %v1705 = vunpack.c.h.b16 %v553
    %v1706 = vunpack.c.l.b16 %v554
    %v1707 = vunpack.c.h.b16 %v554
    %v1708 = vunpack.c.l.b16 %v555
    %v1709 = vunpack.c.h.b16 %v555
    %v1710 = vunpack.c.l.b16 %v556
    %v1711 = vunpack.c.h.b16 %v556
    %v1712 = vunpack.c.l.b16 %v557
    %v1713 = vunpack.c.h.b16 %v557
    %v1714 = vunpack.c.l.b16 %v558
    %v1715 = vunpack.c.h.b16 %v558
    %v1716 = vunpack.c.l.b16 %v559
    %v1717 = vunpack.c.h.b16 %v559
    %v1718 = vunpack.c.l.b16 %v560
    %v1719 = vunpack.c.h.b16 %v560
    %v1720 = vunpack.c.l.b16 %v561
    %v1721 = vunpack.c.h.b16 %v561
    %v1722 = vunpack.c.l.b16 %v562
    %v1723 = vunpack.c.h.b16 %v562
    %v1724 = vunpack.c.l.b16 %v563
    %v1725 = vunpack.c.h.b16 %v563
    %v1726 = vunpack.c.l.b16 %v564
    %v1727 = vunpack.c.h.b16 %v564
    %v1728 = vunpack.c.l.b16 %v565
    %v1729 = vunpack.c.h.b16 %v565
    %v1730 = vpack.c.b16 %v964, %v962
    %v1731 = vpack.c.b16 %v965, %v963
    %v1732 = vpack.c.b16 %v968, %v966
    %v1733 = vpack.c.b16 %v969, %v967
    %v1734 = vpack.c.b16 %v972, %v970
    %v1735 = vpack.c.b16 %v973, %v971
    %v1736 = vpack.c.b16 %v976, %v974
    %v1737 = vpack.c.b16 %v977, %v975
    %v1738 = vpack.c.b16 %v980, %v978
    %v1739 = vpack.c.b16 %v981, %v979
    %v1740 = vpack.c.b16 %v984, %v982
    %v1741 = vpack.c.b16 %v985, %v983
    %v1742 = vpack.c.b16 %v988, %v986
    %v1743 = vpack.c.b16 %v989, %v987
    %v1744 = vpack.c.b16 %v992, %v990
    %v1745 = vpack.c.b16 %v993, %v991
    %v1746 = vpack.c.b16 %v996, %v994
    %v1747 = vpack.c.b16 %v997, %v995
    %v1748 = vpack.c.b16 %v1000, %v998
    %v1749 = vpack.c.b16 %v1001, %v999
    %v1750 = vpack.c.b16 %v1004, %v1002
    %v1751 = vpack.c.b16 %v1005, %v1003
    %v1752 = vpack.c.b16 %v1008, %v1006
    %v1753 = vpack.c.b16 %v1009, %v1007
    %v1754 = vpack.c.b16 %v1012, %v1010
    %v1755 = vpack.c.b16 %v1013, %v1011
    %v1756 = vpack.c.b16 %v1016, %v1014
    %v1757 = vpack.c.b16 %v1017, %v1015
    %v1758 = vpack.c.b16 %v1020, %v1018
    %v1759 = vpack.c.b16 %v1021, %v1019
    %v1760 = vpack.c.b16 %v1024, %v1022
    %v1761 = vpack.c.b16 %v1025, %v1023
    %v1762 = vpack.c.b16 %v1028, %v1026
    %v1763 = vpack.c.b16 %v1029, %v1027
    %v1764 = vpack.c.b16 %v1032, %v1030
    %v1765 = vpack.c.b16 %v1033, %v1031
    %v1766 = vpack.c.b16 %v1036, %v1034
    %v1767 = vpack.c.b16 %v1037, %v1035
    %v1768 = vpack.c.b16 %v1040, %v1038
    %v1769 = vpack.c.b16 %v1041, %v1039
    %v1770 = vpack.c.b16 %v1044, %v1042
    %v1771 = vpack.c.b16 %v1045, %v1043
    %v1772 = vpack.c.b16 %v1048, %v1046
    %v1773 = vpack.c.b16 %v1049, %v1047
    %v1774 = vpack.c.b16 %v1052, %v1050
    %v1775 = vpack.c.b16 %v1053, %v1051
    %v1776 = vpack.c.b16 %v1056, %v1054
    %v1777 = vpack.c.b16 %v1057, %v1055
    %v1778 = vpack.c.b16 %v1060, %v1058
    %v1779 = vpack.c.b16 %v1061, %v1059
    %v1780 = vpack.c.b16 %v1064, %v1062
    %v1781 = vpack.c.b16 %v1065, %v1063
    %v1782 = vpack.c.b16 %v1068, %v1066
    %v1783 = vpack.c.b16 %v1069, %v1067
    %v1784 = vpack.c.b16 %v1072, %v1070
    %v1785 = vpack.c.b16 %v1073, %v1071
    %v1786 = vpack.c.b16 %v1076, %v1074
    %v1787 = vpack.c.b16 %v1077, %v1075
    %v1788 = vpack.c.b16 %v1080, %v1078
    %v1789 = vpack.c.b16 %v1081, %v1079
    %v1790 = vpack.c.b16 %v1084, %v1082
    %v1791 = vpack.c.b16 %v1085, %v1083
    %v1792 = vpack.c.b16 %v1088, %v1086
    %v1793 = vpack.c.b16 %v1089, %v1087
    %v1794 = vpack.c.b16 %v1092, %v1090
    %v1795 = vpack.c.b16 %v1093, %v1091
    %v1796 = vpack.c.b16 %v1096, %v1094
    %v1797 = vpack.c.b16 %v1097, %v1095
    %v1798 = vpack.c.b16 %v1100, %v1098
    %v1799 = vpack.c.b16 %v1101, %v1099
    %v1800 = vpack.c.b16 %v1104, %v1102
    %v1801 = vpack.c.b16 %v1105, %v1103
    %v1802 = vpack.c.b16 %v1108, %v1106
    %v1803 = vpack.c.b16 %v1109, %v1107
    %v1804 = vpack.c.b16 %v1112, %v1110
    %v1805 = vpack.c.b16 %v1113, %v1111
    %v1806 = vpack.c.b16 %v1116, %v1114
    %v1807 = vpack.c.b16 %v1117, %v1115
    %v1808 = vpack.c.b16 %v1120, %v1118
    %v1809 = vpack.c.b16 %v1121, %v1119
    %v1810 = vpack.c.b16 %v1124, %v1122
    %v1811 = vpack.c.b16 %v1125, %v1123
    %v1812 = vpack.c.b16 %v1128, %v1126
    %v1813 = vpack.c.b16 %v1129, %v1127
    %v1814 = vpack.c.b16 %v1132, %v1130
    %v1815 = vpack.c.b16 %v1133, %v1131
    %v1816 = vpack.c.b16 %v1136, %v1134
    %v1817 = vpack.c.b16 %v1137, %v1135
    %v1818 = vpack.c.b16 %v1140, %v1138
    %v1819 = vpack.c.b16 %v1141, %v1139
    %v1820 = vpack.c.b16 %v1144, %v1142
    %v1821 = vpack.c.b16 %v1145, %v1143
    %v1822 = vpack.c.b16 %v1148, %v1146
    %v1823 = vpack.c.b16 %v1149, %v1147
    %v1824 = vpack.c.b16 %v1152, %v1150
    %v1825 = vpack.c.b16 %v1153, %v1151
    %v1826 = vpack.c.b16 %v1156, %v1154
    %v1827 = vpack.c.b16 %v1157, %v1155
    %v1828 = vpack.c.b16 %v1160, %v1158
    %v1829 = vpack.c.b16 %v1161, %v1159
    %v1830 = vpack.c.b16 %v1164, %v1162
    %v1831 = vpack.c.b16 %v1165, %v1163
    %v1832 = vpack.c.b16 %v1168, %v1166
    %v1833 = vpack.c.b16 %v1169, %v1167
    %v1834 = vpack.c.b16 %v1172, %v1170
    %v1835 = vpack.c.b16 %v1173, %v1171
    %v1836 = vpack.c.b16 %v1176, %v1174
    %v1837 = vpack.c.b16 %v1177, %v1175
    %v1838 = vpack.c.b16 %v1180, %v1178
    %v1839 = vpack.c.b16 %v1181, %v1179
    %v1840 = vpack.c.b16 %v1184, %v1182
    %v1841 = vpack.c.b16 %v1185, %v1183
    %v1842 = vpack.c.b16 %v1188, %v1186
    %v1843 = vpack.c.b16 %v1189, %v1187
    %v1844 = vpack.c.b16 %v1192, %v1190
    %v1845 = vpack.c.b16 %v1193, %v1191
    %v1846 = vpack.c.b16 %v1196, %v1194
    %v1847 = vpack.c.b16 %v1197, %v1195
    %v1848 = vpack.c.b16 %v1200, %v1198
    %v1849 = vpack.c.b16 %v1201, %v1199
    %v1850 = vpack.c.b16 %v1204, %v1202
    %v1851 = vpack.c.b16 %v1205, %v1203
    %v1852 = vpack.c.b16 %v1208, %v1206
    %v1853 = vpack.c.b16 %v1209, %v1207
    %v1854 = vpack.c.b16 %v1212, %v1210
    %v1855 = vpack.c.b16 %v1213, %v1211
    %v1856 = vpack.c.b16 %v1216, %v1214
    %v1857 = vpack.c.b16 %v1217, %v1215
    %v1858 = vpack.c.b16 %v1220, %v1218
    %v1859 = vpack.c.b16 %v1221, %v1219
    %v1860 = vpack.c.b16 %v1224, %v1222
    %v1861 = vpack.c.b16 %v1225, %v1223
    %v1862 = vpack.c.b16 %v1228, %v1226
    %v1863 = vpack.c.b16 %v1229, %v1227
    %v1864 = vpack.c.b16 %v1232, %v1230
    %v1865 = vpack.c.b16 %v1233, %v1231
    %v1866 = vpack.c.b16 %v1236, %v1234
    %v1867 = vpack.c.b16 %v1237, %v1235
    %v1868 = vpack.c.b16 %v1240, %v1238
    %v1869 = vpack.c.b16 %v1241, %v1239
    %v1870 = vpack.c.b16 %v1244, %v1242
    %v1871 = vpack.c.b16 %v1245, %v1243
    %v1872 = vpack.c.b16 %v1248, %v1246
    %v1873 = vpack.c.b16 %v1249, %v1247
    %v1874 = vpack.c.b16 %v1252, %v1250
    %v1875 = vpack.c.b16 %v1253, %v1251
    %v1876 = vpack.c.b16 %v1256, %v1254
    %v1877 = vpack.c.b16 %v1257, %v1255
    %v1878 = vpack.c.b16 %v1260, %v1258
    %v1879 = vpack.c.b16 %v1261, %v1259
    %v1880 = vpack.c.b16 %v1264, %v1262
    %v1881 = vpack.c.b16 %v1265, %v1263
    %v1882 = vpack.c.b16 %v1268, %v1266
    %v1883 = vpack.c.b16 %v1269, %v1267
    %v1884 = vpack.c.b16 %v1272, %v1270
    %v1885 = vpack.c.b16 %v1273, %v1271
    %v1886 = vpack.c.b16 %v1276, %v1274
    %v1887 = vpack.c.b16 %v1277, %v1275
    %v1888 = vpack.c.b16 %v1280, %v1278
    %v1889 = vpack.c.b16 %v1281, %v1279
    %v1890 = vpack.c.b16 %v1284, %v1282
    %v1891 = vpack.c.b16 %v1285, %v1283
    %v1892 = vpack.c.b16 %v1288, %v1286
    %v1893 = vpack.c.b16 %v1289, %v1287
    %v1894 = vpack.c.b16 %v1292, %v1290
    %v1895 = vpack.c.b16 %v1293, %v1291
    %v1896 = vpack.c.b16 %v1296, %v1294
    %v1897 = vpack.c.b16 %v1297, %v1295
    %v1898 = vpack.c.b16 %v1300, %v1298
    %v1899 = vpack.c.b16 %v1301, %v1299
    %v1900 = vpack.c.b16 %v1304, %v1302
    %v1901 = vpack.c.b16 %v1305, %v1303
    %v1902 = vpack.c.b16 %v1308, %v1306
    %v1903 = vpack.c.b16 %v1309, %v1307
    %v1904 = vpack.c.b16 %v1312, %v1310
    %v1905 = vpack.c.b16 %v1313, %v1311
    %v1906 = vpack.c.b16 %v1316, %v1314
    %v1907 = vpack.c.b16 %v1317, %v1315
    %v1908 = vpack.c.b16 %v1320, %v1318
    %v1909 = vpack.c.b16 %v1321, %v1319
    %v1910 = vpack.c.b16 %v1324, %v1322
    %v1911 = vpack.c.b16 %v1325, %v1323
    %v1912 = vpack.c.b16 %v1328, %v1326
    %v1913 = vpack.c.b16 %v1329, %v1327
    %v1914 = vpack.c.b16 %v1332, %v1330
    %v1915 = vpack.c.b16 %v1333, %v1331
    %v1916 = vpack.c.b16 %v1336, %v1334
    %v1917 = vpack.c.b16 %v1337, %v1335
    %v1918 = vpack.c.b16 %v1340, %v1338
    %v1919 = vpack.c.b16 %v1341, %v1339
    %v1920 = vpack.c.b16 %v1344, %v1342
    %v1921 = vpack.c.b16 %v1345, %v1343
    %v1922 = vpack.c.b16 %v1348, %v1346
    %v1923 = vpack.c.b16 %v1349, %v1347
    %v1924 = vpack.c.b16 %v1352, %v1350
    %v1925 = vpack.c.b16 %v1353, %v1351
    %v1926 = vpack.c.b16 %v1356, %v1354
    %v1927 = vpack.c.b16 %v1357, %v1355
    %v1928 = vpack.c.b16 %v1360, %v1358
    %v1929 = vpack.c.b16 %v1361, %v1359
    %v1930 = vpack.c.b16 %v1364, %v1362
    %v1931 = vpack.c.b16 %v1365, %v1363
    %v1932 = vpack.c.b16 %v1368, %v1366
    %v1933 = vpack.c.b16 %v1369, %v1367
    %v1934 = vpack.c.b16 %v1372, %v1370
    %v1935 = vpack.c.b16 %v1373, %v1371
    %v1936 = vpack.c.b16 %v1376, %v1374
    %v1937 = vpack.c.b16 %v1377, %v1375
    %v1938 = vpack.c.b16 %v1380, %v1378
    %v1939 = vpack.c.b16 %v1381, %v1379
    %v1940 = vpack.c.b16 %v1384, %v1382
    %v1941 = vpack.c.b16 %v1385, %v1383
    %v1942 = vpack.c.b16 %v1388, %v1386
    %v1943 = vpack.c.b16 %v1389, %v1387
    %v1944 = vpack.c.b16 %v1392, %v1390
    %v1945 = vpack.c.b16 %v1393, %v1391
    %v1946 = vpack.c.b16 %v1396, %v1394
    %v1947 = vpack.c.b16 %v1397, %v1395
    %v1948 = vpack.c.b16 %v1400, %v1398
    %v1949 = vpack.c.b16 %v1401, %v1399
    %v1950 = vpack.c.b16 %v1404, %v1402
    %v1951 = vpack.c.b16 %v1405, %v1403
    %v1952 = vpack.c.b16 %v1408, %v1406
    %v1953 = vpack.c.b16 %v1409, %v1407
    %v1954 = vpack.c.b16 %v1412, %v1410
    %v1955 = vpack.c.b16 %v1413, %v1411
    %v1956 = vpack.c.b16 %v1416, %v1414
    %v1957 = vpack.c.b16 %v1417, %v1415
    %v1958 = vpack.c.b16 %v1420, %v1418
    %v1959 = vpack.c.b16 %v1421, %v1419
    %v1960 = vpack.c.b16 %v1424, %v1422
    %v1961 = vpack.c.b16 %v1425, %v1423
    %v1962 = vpack.c.b16 %v1428, %v1426
    %v1963 = vpack.c.b16 %v1429, %v1427
    %v1964 = vpack.c.b16 %v1432, %v1430
    %v1965 = vpack.c.b16 %v1433, %v1431
    %v1966 = vpack.c.b16 %v1436, %v1434
    %v1967 = vpack.c.b16 %v1437, %v1435
    %v1968 = vpack.c.b16 %v1440, %v1438
    %v1969 = vpack.c.b16 %v1441, %v1439
    %v1970 = vpack.c.b16 %v1444, %v1442
    %v1971 = vpack.c.b16 %v1445, %v1443
    %v1972 = vpack.c.b16 %v1448, %v1446
    %v1973 = vpack.c.b16 %v1449, %v1447
    %v1974 = vpack.c.b16 %v1452, %v1450
    %v1975 = vpack.c.b16 %v1453, %v1451
    %v1976 = vpack.c.b16 %v1456, %v1454
    %v1977 = vpack.c.b16 %v1457, %v1455
    %v1978 = vpack.c.b16 %v1460, %v1458
    %v1979 = vpack.c.b16 %v1461, %v1459
    %v1980 = vpack.c.b16 %v1464, %v1462
    %v1981 = vpack.c.b16 %v1465, %v1463
    %v1982 = vpack.c.b16 %v1468, %v1466
    %v1983 = vpack.c.b16 %v1469, %v1467
    %v1984 = vpack.c.b16 %v1472, %v1470
    %v1985 = vpack.c.b16 %v1473, %v1471
    %v1986 = vpack.c.b16 %v1476, %v1474
    %v1987 = vpack.c.b16 %v1477, %v1475
    %v1988 = vpack.c.b16 %v1480, %v1478
    %v1989 = vpack.c.b16 %v1481, %v1479
    %v1990 = vpack.c.b16 %v1484, %v1482
    %v1991 = vpack.c.b16 %v1485, %v1483
    %v1992 = vpack.c.b16 %v1488, %v1486
    %v1993 = vpack.c.b16 %v1489, %v1487
    %v1994 = vpack.c.b16 %v1492, %v1490
    %v1995 = vpack.c.b16 %v1493, %v1491
    %v1996 = vpack.c.b16 %v1496, %v1494
    %v1997 = vpack.c.b16 %v1497, %v1495
    %v1998 = vpack.c.b16 %v1500, %v1498
    %v1999 = vpack.c.b16 %v1501, %v1499
    %v2000 = vpack.c.b16 %v1504, %v1502
    %v2001 = vpack.c.b16 %v1505, %v1503
    %v2002 = vpack.c.b16 %v1508, %v1506
    %v2003 = vpack.c.b16 %v1509, %v1507
    %v2004 = vpack.c.b16 %v1512, %v1510
    %v2005 = vpack.c.b16 %v1513, %v1511
    %v2006 = vpack.c.b16 %v1516, %v1514
    %v2007 = vpack.c.b16 %v1517, %v1515
    %v2008 = vpack.c.b16 %v1520, %v1518
    %v2009 = vpack.c.b16 %v1521, %v1519
    %v2010 = vpack.c.b16 %v1524, %v1522
    %v2011 = vpack.c.b16 %v1525, %v1523
    %v2012 = vpack.c.b16 %v1528, %v1526
    %v2013 = vpack.c.b16 %v1529, %v1527
    %v2014 = vpack.c.b16 %v1532, %v1530
    %v2015 = vpack.c.b16 %v1533, %v1531
    %v2016 = vpack.c.b16 %v1536, %v1534
    %v2017 = vpack.c.b16 %v1537, %v1535
    %v2018 = vpack.c.b16 %v1540, %v1538
    %v2019 = vpack.c.b16 %v1541, %v1539
    %v2020 = vpack.c.b16 %v1544, %v1542
    %v2021 = vpack.c.b16 %v1545, %v1543
    %v2022 = vpack.c.b16 %v1548, %v1546
    %v2023 = vpack.c.b16 %v1549, %v1547
    %v2024 = vpack.c.b16 %v1552, %v1550
    %v2025 = vpack.c.b16 %v1553, %v1551
    %v2026 = vpack.c.b16 %v1556, %v1554
    %v2027 = vpack.c.b16 %v1557, %v1555
    %v2028 = vpack.c.b16 %v1560, %v1558
    %v2029 = vpack.c.b16 %v1561, %v1559
    %v2030 = vpack.c.b16 %v1564, %v1562
    %v2031 = vpack.c.b16 %v1565, %v1563
    %v2032 = vpack.c.b16 %v1568, %v1566
    %v2033 = vpack.c.b16 %v1569, %v1567
    %v2034 = vpack.c.b16 %v1572, %v1570
    %v2035 = vpack.c.b16 %v1573, %v1571
    %v2036 = vpack.c.b16 %v1576, %v1574
    %v2037 = vpack.c.b16 %v1577, %v1575
    %v2038 = vpack.c.b16 %v1580, %v1578
    %v2039 = vpack.c.b16 %v1581, %v1579
    %v2040 = vpack.c.b16 %v1584, %v1582
    %v2041 = vpack.c.b16 %v1585, %v1583
    %v2042 = vpack.c.b16 %v1588, %v1586
    %v2043 = vpack.c.b16 %v1589, %v1587
    %v2044 = vpack.c.b16 %v1592, %v1590
    %v2045 = vpack.c.b16 %v1593, %v1591
    %v2046 = vpack.c.b16 %v1596, %v1594
    %v2047 = vpack.c.b16 %v1597, %v1595
    %v2048 = vpack.c.b16 %v1600, %v1598
    %v2049 = vpack.c.b16 %v1601, %v1599
    %v2050 = vpack.c.b16 %v1604, %v1602
    %v2051 = vpack.c.b16 %v1605, %v1603
    %v2052 = vpack.c.b16 %v1608, %v1606
    %v2053 = vpack.c.b16 %v1609, %v1607
    %v2054 = vpack.c.b16 %v1612, %v1610
    %v2055 = vpack.c.b16 %v1613, %v1611
    %v2056 = vpack.c.b16 %v1616, %v1614
    %v2057 = vpack.c.b16 %v1617, %v1615
    %v2058 = vpack.c.b16 %v1620, %v1618
    %v2059 = vpack.c.b16 %v1621, %v1619
    %v2060 = vpack.c.b16 %v1624, %v1622
    %v2061 = vpack.c.b16 %v1625, %v1623
    %v2062 = vpack.c.b16 %v1628, %v1626
    %v2063 = vpack.c.b16 %v1629, %v1627
    %v2064 = vpack.c.b16 %v1632, %v1630
    %v2065 = vpack.c.b16 %v1633, %v1631
    %v2066 = vpack.c.b16 %v1636, %v1634
    %v2067 = vpack.c.b16 %v1637, %v1635
    %v2068 = vpack.c.b16 %v1640, %v1638
    %v2069 = vpack.c.b16 %v1641, %v1639
    %v2070 = vpack.c.b16 %v1644, %v1642
    %v2071 = vpack.c.b16 %v1645, %v1643
    %v2072 = vpack.c.b16 %v1648, %v1646
    %v2073 = vpack.c.b16 %v1649, %v1647
    %v2074 = vpack.c.b16 %v1652, %v1650
    %v2075 = vpack.c.b16 %v1653, %v1651
    %v2076 = vpack.c.b16 %v1656, %v1654
    %v2077 = vpack.c.b16 %v1657, %v1655
    %v2078 = vpack.c.b16 %v1660, %v1658
    %v2079 = vpack.c.b16 %v1661, %v1659
    %v2080 = vpack.c.b16 %v1664, %v1662
    %v2081 = vpack.c.b16 %v1665, %v1663
    %v2082 = vpack.c.b16 %v1668, %v1666
    %v2083 = vpack.c.b16 %v1669, %v1667
    %v2084 = vpack.c.b16 %v1672, %v1670
    %v2085 = vpack.c.b16 %v1673, %v1671
    %v2086 = vpack.c.b16 %v1676, %v1674
    %v2087 = vpack.c.b16 %v1677, %v1675
    %v2088 = vpack.c.b16 %v1680, %v1678
    %v2089 = vpack.c.b16 %v1681, %v1679
    %v2090 = vpack.c.b16 %v1684, %v1682
    %v2091 = vpack.c.b16 %v1685, %v1683
    %v2092 = vpack.c.b16 %v1688, %v1686
    %v2093 = vpack.c.b16 %v1689, %v1687
    %v2094 = vpack.c.b16 %v1692, %v1690
    %v2095 = vpack.c.b16 %v1693, %v1691
    %v2096 = vpack.c.b16 %v1696, %v1694
    %v2097 = vpack.c.b16 %v1697, %v1695
    %v2098 = vpack.c.b16 %v1700, %v1698
    %v2099 = vpack.c.b16 %v1701, %v1699
    %v2100 = vpack.c.b16 %v1704, %v1702
    %v2101 = vpack.c.b16 %v1705, %v1703
    %v2102 = vpack.c.b16 %v1708, %v1706
    %v2103 = vpack.c.b16 %v1709, %v1707
    %v2104 = vpack.c.b16 %v1712, %v1710
    %v2105 = vpack.c.b16 %v1713, %v1711
    %v2106 = vpack.c.b16 %v1716, %v1714
    %v2107 = vpack.c.b16 %v1717, %v1715
    %v2108 = vpack.c.b16 %v1720, %v1718
    %v2109 = vpack.c.b16 %v1721, %v1719
    %v2110 = vpack.c.b16 %v1724, %v1722
    %v2111 = vpack.c.b16 %v1725, %v1723
    %v2112 = vpack.c.b16 %v1728, %v1726
    %v2113 = vpack.c.b16 %v1729, %v1727
    %2498 = vmatprep.subr.bf16.mxu0 %v1731
    %2499 = vmatpush1.bf16.msra.mxu0 %v1730
    %2500 = vmatprep.subr.bf16.mxu0 %v1733
    %2501 = vmatpush1.bf16.msra.mxu0 %v1732
    %2502 = vmatprep.subr.bf16.mxu0 %v1735
    %2503 = vmatpush1.bf16.msra.mxu0 %v1734
    %2504 = vmatprep.subr.bf16.mxu0 %v1737
    %2505 = vmatpush1.bf16.msra.mxu0 %v1736
    %2506 = vmatprep.subr.bf16.mxu0 %v1739
    %2507 = vmatpush1.bf16.msra.mxu0 %v1738
    %2508 = vmatprep.subr.bf16.mxu0 %v1741
    %2509 = vmatpush1.bf16.msra.mxu0 %v1740
    %2510 = vmatprep.subr.bf16.mxu0 %v1743
    %2511 = vmatpush1.bf16.msra.mxu0 %v1742
    %2512 = vmatprep.subr.bf16.mxu0 %v1745
    %2513 = vmatpush1.bf16.msra.mxu0 %v1744
    %2514 = vmatprep.subr.bf16.mxu0 %v1747
    %2515 = vmatpush1.bf16.msra.mxu0 %v1746
    %2516 = vmatprep.subr.bf16.mxu0 %v1749
    %2517 = vmatpush1.bf16.msra.mxu0 %v1748
    %2518 = vmatprep.subr.bf16.mxu0 %v1751
    %2519 = vmatpush1.bf16.msra.mxu0 %v1750
    %2520 = vmatprep.subr.bf16.mxu0 %v1753
    %2521 = vmatpush1.bf16.msra.mxu0 %v1752
    %2522 = vmatprep.subr.bf16.mxu0 %v1755
    %2523 = vmatpush1.bf16.msra.mxu0 %v1754
    %2524 = vmatprep.subr.bf16.mxu0 %v1757
    %2525 = vmatpush1.bf16.msra.mxu0 %v1756
    %2526 = vmatprep.subr.bf16.mxu0 %v1759
    %2527 = vmatpush1.bf16.msra.mxu0 %v1758
    %2528 = vmatprep.subr.bf16.mxu0 %v1761
    %2529 = vmatpush1.bf16.msra.mxu0 %v1760
    %2530 = vmatprep.mubr.bf16.mxu0 %v159
    %2531 = vmatmul.mubr.bf16.gmra.mrb[0].mxu0 %v158
    %v2532 = vpop.f32.mrb[0].mxu0
    %v2533 = vadd.f32 %v571, %v2532
    %v2534 = vpop.f32.mrb[0].mxu0
    %v2535 = vadd.f32 %v575, %v2534
    %v2536 = vpop.f32.mrb[0].mxu0
    %v2537 = vpop.f32.mrb[0].mxu0
    %2538 = vdwg.mxu0
    %2539 = vmatprep.subr.bf16.mxu0 %v1763
    %2540 = vmatpush1.bf16.msra.mxu0 %v1762
    %2541 = vmatprep.subr.bf16.mxu0 %v1765
    %2542 = vmatpush1.bf16.msra.mxu0 %v1764
    %2543 = vmatprep.subr.bf16.mxu0 %v1767
    %2544 = vmatpush1.bf16.msra.mxu0 %v1766
    %2545 = vmatprep.subr.bf16.mxu0 %v1769
    %2546 = vmatpush1.bf16.msra.mxu0 %v1768
    %2547 = vmatprep.subr.bf16.mxu0 %v1771
    %2548 = vmatpush1.bf16.msra.mxu0 %v1770
    %2549 = vmatprep.subr.bf16.mxu0 %v1773
    %2550 = vmatpush1.bf16.msra.mxu0 %v1772
    %2551 = vmatprep.subr.bf16.mxu0 %v1775
    %2552 = vmatpush1.bf16.msra.mxu0 %v1774
    %2553 = vmatprep.subr.bf16.mxu0 %v1777
    %2554 = vmatpush1.bf16.msra.mxu0 %v1776
    %2555 = vmatprep.subr.bf16.mxu0 %v1779
    %2556 = vmatpush1.bf16.msra.mxu0 %v1778
    %2557 = vmatprep.subr.bf16.mxu0 %v1781
    %2558 = vmatpush1.bf16.msra.mxu0 %v1780
    %2559 = vmatprep.subr.bf16.mxu0 %v1783
    %2560 = vmatpush1.bf16.msra.mxu0 %v1782
    %2561 = vmatprep.subr.bf16.mxu0 %v1785
    %2562 = vmatpush1.bf16.msra.mxu0 %v1784
    %2563 = vmatprep.subr.bf16.mxu0 %v1787
    %2564 = vmatpush1.bf16.msra.mxu0 %v1786
    %2565 = vmatprep.subr.bf16.mxu0 %v1789
    %2566 = vmatpush1.bf16.msra.mxu0 %v1788
    %2567 = vmatprep.subr.bf16.mxu0 %v1791
    %2568 = vmatpush1.bf16.msra.mxu0 %v1790
    %2569 = vmatprep.subr.bf16.mxu0 %v1793
    %2570 = vmatpush1.bf16.msra.mxu0 %v1792
    %2571 = vmatprep.mubr.bf16.mxu0 %v161
    %2572 = vmatmul.mubr.bf16.gmra.mrb[0].mxu0 %v160
    %v2573 = vpop.f32.mrb[0].mxu0
    %v2574 = vadd.f32 %v2533, %v2573
    %v2575 = vpop.f32.mrb[0].mxu0
    %v2576 = vadd.f32 %v2535, %v2575
    %v2577 = vpop.f32.mrb[0].mxu0
    %v2578 = vpop.f32.mrb[0].mxu0
    %2579 = vdwg.mxu0
    %2580 = vmatprep.subr.bf16.mxu0 %v1795
    %2581 = vmatpush1.bf16.msra.mxu0 %v1794
    %2582 = vmatprep.subr.bf16.mxu0 %v1797
    %2583 = vmatpush1.bf16.msra.mxu0 %v1796
    %2584 = vmatprep.subr.bf16.mxu0 %v1799
    %2585 = vmatpush1.bf16.msra.mxu0 %v1798
    %2586 = vmatprep.subr.bf16.mxu0 %v1801
    %2587 = vmatpush1.bf16.msra.mxu0 %v1800
    %2588 = vmatprep.subr.bf16.mxu0 %v1803
    %2589 = vmatpush1.bf16.msra.mxu0 %v1802
    %2590 = vmatprep.subr.bf16.mxu0 %v1805
    %2591 = vmatpush1.bf16.msra.mxu0 %v1804
    %2592 = vmatprep.subr.bf16.mxu0 %v1807
    %2593 = vmatpush1.bf16.msra.mxu0 %v1806
    %2594 = vmatprep.subr.bf16.mxu0 %v1809
    %2595 = vmatpush1.bf16.msra.mxu0 %v1808
    %2596 = vmatprep.subr.bf16.mxu0 %v1811
    %2597 = vmatpush1.bf16.msra.mxu0 %v1810
    %2598 = vmatprep.subr.bf16.mxu0 %v1813
    %2599 = vmatpush1.bf16.msra.mxu0 %v1812
    %2600 = vmatprep.subr.bf16.mxu0 %v1815
    %2601 = vmatpush1.bf16.msra.mxu0 %v1814
    %2602 = vmatprep.subr.bf16.mxu0 %v1817
    %2603 = vmatpush1.bf16.msra.mxu0 %v1816
    %2604 = vmatprep.subr.bf16.mxu0 %v1819
    %2605 = vmatpush1.bf16.msra.mxu0 %v1818
    %2606 = vmatprep.subr.bf16.mxu0 %v1821
    %2607 = vmatpush1.bf16.msra.mxu0 %v1820
    %2608 = vmatprep.subr.bf16.mxu0 %v1823
    %2609 = vmatpush1.bf16.msra.mxu0 %v1822
    %2610 = vmatprep.subr.bf16.mxu0 %v1825
    %2611 = vmatpush1.bf16.msra.mxu0 %v1824
    %2612 = vmatprep.mubr.bf16.mxu0 %v163
    %2613 = vmatmul.mubr.bf16.gmra.mrb[0].mxu0 %v162
    %v2614 = vpop.f32.mrb[0].mxu0
    %v2615 = vadd.f32 %v2574, %v2614
    %v2616 = vpop.f32.mrb[0].mxu0
    %v2617 = vadd.f32 %v2576, %v2616
    %v2618 = vpop.f32.mrb[0].mxu0
    %v2619 = vpop.f32.mrb[0].mxu0
    %2620 = vdwg.mxu0
    %2621 = vmatprep.subr.bf16.mxu0 %v1827
    %2622 = vmatpush1.bf16.msra.mxu0 %v1826
    %2623 = vmatprep.subr.bf16.mxu0 %v1829
    %2624 = vmatpush1.bf16.msra.mxu0 %v1828
    %2625 = vmatprep.subr.bf16.mxu0 %v1831
    %2626 = vmatpush1.bf16.msra.mxu0 %v1830
    %2627 = vmatprep.subr.bf16.mxu0 %v1833
    %2628 = vmatpush1.bf16.msra.mxu0 %v1832
    %2629 = vmatprep.subr.bf16.mxu0 %v1835
    %2630 = vmatpush1.bf16.msra.mxu0 %v1834
    %2631 = vmatprep.subr.bf16.mxu0 %v1837
    %2632 = vmatpush1.bf16.msra.mxu0 %v1836
    %2633 = vmatprep.subr.bf16.mxu0 %v1839
    %2634 = vmatpush1.bf16.msra.mxu0 %v1838
    %2635 = vmatprep.subr.bf16.mxu0 %v1841
    %2636 = vmatpush1.bf16.msra.mxu0 %v1840
    %2637 = vmatprep.subr.bf16.mxu0 %v1843
    %2638 = vmatpush1.bf16.msra.mxu0 %v1842
    %2639 = vmatprep.subr.bf16.mxu0 %v1845
    %2640 = vmatpush1.bf16.msra.mxu0 %v1844
    %2641 = vmatprep.subr.bf16.mxu0 %v1847
    %2642 = vmatpush1.bf16.msra.mxu0 %v1846
    %2643 = vmatprep.subr.bf16.mxu0 %v1849
    %2644 = vmatpush1.bf16.msra.mxu0 %v1848
    %2645 = vmatprep.subr.bf16.mxu0 %v1851
    %2646 = vmatpush1.bf16.msra.mxu0 %v1850
    %2647 = vmatprep.subr.bf16.mxu0 %v1853
    %2648 = vmatpush1.bf16.msra.mxu0 %v1852
    %2649 = vmatprep.subr.bf16.mxu0 %v1855
    %2650 = vmatpush1.bf16.msra.mxu0 %v1854
    %2651 = vmatprep.subr.bf16.mxu0 %v1857
    %2652 = vmatpush1.bf16.msra.mxu0 %v1856
    %2653 = vmatprep.mubr.bf16.mxu0 %v165
    %2654 = vmatmul.mubr.bf16.gmra.mrb[0].mxu0 %v164
    %v2655 = vpop.f32.mrb[0].mxu0
    %v2656 = vadd.f32 %v2615, %v2655
    %v2657 = vpop.f32.mrb[0].mxu0
    %v2658 = vadd.f32 %v2617, %v2657
    %v2659 = vpop.f32.mrb[0].mxu0
    %v2660 = vpop.f32.mrb[0].mxu0
    %2661 = vdwg.mxu0
    %2662 = vmatprep.subr.bf16.mxu0 %v1859
    %2663 = vmatpush1.bf16.msra.mxu0 %v1858
    %2664 = vmatprep.subr.bf16.mxu0 %v1861
    %2665 = vmatpush1.bf16.msra.mxu0 %v1860
    %2666 = vmatprep.subr.bf16.mxu0 %v1863
    %2667 = vmatpush1.bf16.msra.mxu0 %v1862
    %2668 = vmatprep.subr.bf16.mxu0 %v1865
    %2669 = vmatpush1.bf16.msra.mxu0 %v1864
    %2670 = vmatprep.subr.bf16.mxu0 %v1867
    %2671 = vmatpush1.bf16.msra.mxu0 %v1866
    %2672 = vmatprep.subr.bf16.mxu0 %v1869
    %2673 = vmatpush1.bf16.msra.mxu0 %v1868
    %2674 = vmatprep.subr.bf16.mxu0 %v1871
    %2675 = vmatpush1.bf16.msra.mxu0 %v1870
    %2676 = vmatprep.subr.bf16.mxu0 %v1873
    %2677 = vmatpush1.bf16.msra.mxu0 %v1872
    %2678 = vmatprep.subr.bf16.mxu0 %v1875
    %2679 = vmatpush1.bf16.msra.mxu0 %v1874
    %2680 = vmatprep.subr.bf16.mxu0 %v1877
    %2681 = vmatpush1.bf16.msra.mxu0 %v1876
    %2682 = vmatprep.subr.bf16.mxu0 %v1879
    %2683 = vmatpush1.bf16.msra.mxu0 %v1878
    %2684 = vmatprep.subr.bf16.mxu0 %v1881
    %2685 = vmatpush1.bf16.msra.mxu0 %v1880
    %2686 = vmatprep.subr.bf16.mxu0 %v1883
    %2687 = vmatpush1.bf16.msra.mxu0 %v1882
    %2688 = vmatprep.subr.bf16.mxu0 %v1885
    %2689 = vmatpush1.bf16.msra.mxu0 %v1884
    %2690 = vmatprep.subr.bf16.mxu0 %v1887
    %2691 = vmatpush1.bf16.msra.mxu0 %v1886
    %2692 = vmatprep.subr.bf16.mxu0 %v1889
    %2693 = vmatpush1.bf16.msra.mxu0 %v1888
    %2694 = vmatprep.mubr.bf16.mxu0 %v167
    %2695 = vmatmul.mubr.bf16.gmra.mrb[0].mxu0 %v166
    %v2696 = vpop.f32.mrb[0].mxu0
    %v2697 = vadd.f32 %v2656, %v2696
    %v2698 = vpop.f32.mrb[0].mxu0
    %v2699 = vadd.f32 %v2658, %v2698
    %v2700 = vpop.f32.mrb[0].mxu0
    %v2701 = vpop.f32.mrb[0].mxu0
    %2702 = vdwg.mxu0
    %2703 = vmatprep.subr.bf16.mxu0 %v1891
    %2704 = vmatpush1.bf16.msra.mxu0 %v1890
    %2705 = vmatprep.subr.bf16.mxu0 %v1893
    %2706 = vmatpush1.bf16.msra.mxu0 %v1892
    %2707 = vmatprep.subr.bf16.mxu0 %v1895
    %2708 = vmatpush1.bf16.msra.mxu0 %v1894
    %2709 = vmatprep.subr.bf16.mxu0 %v1897
    %2710 = vmatpush1.bf16.msra.mxu0 %v1896
    %2711 = vmatprep.subr.bf16.mxu0 %v1899
    %2712 = vmatpush1.bf16.msra.mxu0 %v1898
    %2713 = vmatprep.subr.bf16.mxu0 %v1901
    %2714 = vmatpush1.bf16.msra.mxu0 %v1900
    %2715 = vmatprep.subr.bf16.mxu0 %v1903
    %2716 = vmatpush1.bf16.msra.mxu0 %v1902
    %2717 = vmatprep.subr.bf16.mxu0 %v1905
    %2718 = vmatpush1.bf16.msra.mxu0 %v1904
    %2719 = vmatprep.subr.bf16.mxu0 %v1907
    %2720 = vmatpush1.bf16.msra.mxu0 %v1906
    %2721 = vmatprep.subr.bf16.mxu0 %v1909
    %2722 = vmatpush1.bf16.msra.mxu0 %v1908
    %2723 = vmatprep.subr.bf16.mxu0 %v1911
    %2724 = vmatpush1.bf16.msra.mxu0 %v1910
    %2725 = vmatprep.subr.bf16.mxu0 %v1913
    %2726 = vmatpush1.bf16.msra.mxu0 %v1912
    %2727 = vmatprep.subr.bf16.mxu0 %v1915
    %2728 = vmatpush1.bf16.msra.mxu0 %v1914
    %2729 = vmatprep.subr.bf16.mxu0 %v1917
    %2730 = vmatpush1.bf16.msra.mxu0 %v1916
    %2731 = vmatprep.subr.bf16.mxu0 %v1919
    %2732 = vmatpush1.bf16.msra.mxu0 %v1918
    %2733 = vmatprep.subr.bf16.mxu0 %v1921
    %2734 = vmatpush1.bf16.msra.mxu0 %v1920
    %2735 = vmatprep.mubr.bf16.mxu0 %v169
    %2736 = vmatmul.mubr.bf16.gmra.mrb[0].mxu0 %v168
    %v2737 = vpop.f32.mrb[0].mxu0
    %v2738 = vadd.f32 %v2697, %v2737
    %v2739 = vpop.f32.mrb[0].mxu0
    %v2740 = vadd.f32 %v2699, %v2739
    %v2741 = vpop.f32.mrb[0].mxu0
    %v2742 = vpop.f32.mrb[0].mxu0
    %2743 = vdwg.mxu0
    %2744 = vmatprep.subr.bf16.mxu0 %v1923
    %2745 = vmatpush1.bf16.msra.mxu0 %v1922
    %2746 = vmatprep.subr.bf16.mxu0 %v1925
    %2747 = vmatpush1.bf16.msra.mxu0 %v1924
    %2748 = vmatprep.subr.bf16.mxu0 %v1927
    %2749 = vmatpush1.bf16.msra.mxu0 %v1926
    %2750 = vmatprep.subr.bf16.mxu0 %v1929
    %2751 = vmatpush1.bf16.msra.mxu0 %v1928
    %2752 = vmatprep.subr.bf16.mxu0 %v1931
    %2753 = vmatpush1.bf16.msra.mxu0 %v1930
    %2754 = vmatprep.subr.bf16.mxu0 %v1933
    %2755 = vmatpush1.bf16.msra.mxu0 %v1932
    %2756 = vmatprep.subr.bf16.mxu0 %v1935
    %2757 = vmatpush1.bf16.msra.mxu0 %v1934
    %2758 = vmatprep.subr.bf16.mxu0 %v1937
    %2759 = vmatpush1.bf16.msra.mxu0 %v1936
    %2760 = vmatprep.subr.bf16.mxu0 %v1939
    %2761 = vmatpush1.bf16.msra.mxu0 %v1938
    %2762 = vmatprep.subr.bf16.mxu0 %v1941
    %2763 = vmatpush1.bf16.msra.mxu0 %v1940
    %2764 = vmatprep.subr.bf16.mxu0 %v1943
    %2765 = vmatpush1.bf16.msra.mxu0 %v1942
    %2766 = vmatprep.subr.bf16.mxu0 %v1945
    %2767 = vmatpush1.bf16.msra.mxu0 %v1944
    %2768 = vmatprep.subr.bf16.mxu0 %v1947
    %2769 = vmatpush1.bf16.msra.mxu0 %v1946
    %2770 = vmatprep.subr.bf16.mxu0 %v1949
    %2771 = vmatpush1.bf16.msra.mxu0 %v1948
    %2772 = vmatprep.subr.bf16.mxu0 %v1951
    %2773 = vmatpush1.bf16.msra.mxu0 %v1950
    %2774 = vmatprep.subr.bf16.mxu0 %v1953
    %2775 = vmatpush1.bf16.msra.mxu0 %v1952
    %2776 = vmatprep.mubr.bf16.mxu0 %v171
    %2777 = vmatmul.mubr.bf16.gmra.mrb[0].mxu0 %v170
    %v2778 = vpop.f32.mrb[0].mxu0
    %v2779 = vadd.f32 %v2738, %v2778
    %v2780 = vpop.f32.mrb[0].mxu0
    %v2781 = vadd.f32 %v2740, %v2780
    %v2782 = vpop.f32.mrb[0].mxu0
    %v2783 = vpop.f32.mrb[0].mxu0
    %2784 = vdwg.mxu0
    %2785 = vmatprep.subr.bf16.mxu0 %v1955
    %2786 = vmatpush1.bf16.msra.mxu0 %v1954
    %2787 = vmatprep.subr.bf16.mxu0 %v1957
    %2788 = vmatpush1.bf16.msra.mxu0 %v1956
    %2789 = vmatprep.subr.bf16.mxu0 %v1959
    %2790 = vmatpush1.bf16.msra.mxu0 %v1958
    %2791 = vmatprep.subr.bf16.mxu0 %v1961
    %2792 = vmatpush1.bf16.msra.mxu0 %v1960
    %2793 = vmatprep.subr.bf16.mxu0 %v1963
    %2794 = vmatpush1.bf16.msra.mxu0 %v1962
    %2795 = vmatprep.subr.bf16.mxu0 %v1965
    %2796 = vmatpush1.bf16.msra.mxu0 %v1964
    %2797 = vmatprep.subr.bf16.mxu0 %v1967
    %2798 = vmatpush1.bf16.msra.mxu0 %v1966
    %2799 = vmatprep.subr.bf16.mxu0 %v1969
    %2800 = vmatpush1.bf16.msra.mxu0 %v1968
    %2801 = vmatprep.subr.bf16.mxu0 %v1971
    %2802 = vmatpush1.bf16.msra.mxu0 %v1970
    %2803 = vmatprep.subr.bf16.mxu0 %v1973
    %2804 = vmatpush1.bf16.msra.mxu0 %v1972
    %2805 = vmatprep.subr.bf16.mxu0 %v1975
    %2806 = vmatpush1.bf16.msra.mxu0 %v1974
    %2807 = vmatprep.subr.bf16.mxu0 %v1977
    %2808 = vmatpush1.bf16.msra.mxu0 %v1976
    %2809 = vmatprep.subr.bf16.mxu0 %v1979
    %2810 = vmatpush1.bf16.msra.mxu0 %v1978
    %2811 = vmatprep.subr.bf16.mxu0 %v1981
    %2812 = vmatpush1.bf16.msra.mxu0 %v1980
    %2813 = vmatprep.subr.bf16.mxu0 %v1983
    %2814 = vmatpush1.bf16.msra.mxu0 %v1982
    %2815 = vmatprep.subr.bf16.mxu0 %v1985
    %2816 = vmatpush1.bf16.msra.mxu0 %v1984
    %2817 = vmatprep.mubr.bf16.mxu0 %v173
    %2818 = vmatmul.mubr.bf16.gmra.mrb[0].mxu0 %v172
    %v2819 = vpop.f32.mrb[0].mxu0
    %v2820 = vadd.f32 %v2779, %v2819
    %v2821 = vpop.f32.mrb[0].mxu0
    %v2822 = vadd.f32 %v2781, %v2821
    %v2823 = vpop.f32.mrb[0].mxu0
    %v2824 = vpop.f32.mrb[0].mxu0
    %2825 = vdwg.mxu0
    %2826 = vmatprep.subr.bf16.mxu0 %v1987
    %2827 = vmatpush1.bf16.msra.mxu0 %v1986
    %2828 = vmatprep.subr.bf16.mxu0 %v1989
    %2829 = vmatpush1.bf16.msra.mxu0 %v1988
    %2830 = vmatprep.subr.bf16.mxu0 %v1991
    %2831 = vmatpush1.bf16.msra.mxu0 %v1990
    %2832 = vmatprep.subr.bf16.mxu0 %v1993
    %2833 = vmatpush1.bf16.msra.mxu0 %v1992
    %2834 = vmatprep.subr.bf16.mxu0 %v1995
    %2835 = vmatpush1.bf16.msra.mxu0 %v1994
    %2836 = vmatprep.subr.bf16.mxu0 %v1997
    %2837 = vmatpush1.bf16.msra.mxu0 %v1996
    %2838 = vmatprep.subr.bf16.mxu0 %v1999
    %2839 = vmatpush1.bf16.msra.mxu0 %v1998
    %2840 = vmatprep.subr.bf16.mxu0 %v2001
    %2841 = vmatpush1.bf16.msra.mxu0 %v2000
    %2842 = vmatprep.subr.bf16.mxu0 %v2003
    %2843 = vmatpush1.bf16.msra.mxu0 %v2002
    %2844 = vmatprep.subr.bf16.mxu0 %v2005
    %2845 = vmatpush1.bf16.msra.mxu0 %v2004
    %2846 = vmatprep.subr.bf16.mxu0 %v2007
    %2847 = vmatpush1.bf16.msra.mxu0 %v2006
    %2848 = vmatprep.subr.bf16.mxu0 %v2009
    %2849 = vmatpush1.bf16.msra.mxu0 %v2008
    %2850 = vmatprep.subr.bf16.mxu0 %v2011
    %2851 = vmatpush1.bf16.msra.mxu0 %v2010
    %2852 = vmatprep.subr.bf16.mxu0 %v2013
    %2853 = vmatpush1.bf16.msra.mxu0 %v2012
    %2854 = vmatprep.subr.bf16.mxu0 %v2015
    %2855 = vmatpush1.bf16.msra.mxu0 %v2014
    %2856 = vmatprep.subr.bf16.mxu0 %v2017
    %2857 = vmatpush1.bf16.msra.mxu0 %v2016
    %2858 = vmatprep.mubr.bf16.mxu0 %v175
    %2859 = vmatmul.mubr.bf16.gmra.mrb[0].mxu0 %v174
    %v2860 = vpop.f32.mrb[0].mxu0
    %v2861 = vadd.f32 %v2820, %v2860
    %v2862 = vpop.f32.mrb[0].mxu0
    %v2863 = vadd.f32 %v2822, %v2862
    %v2864 = vpop.f32.mrb[0].mxu0
    %v2865 = vpop.f32.mrb[0].mxu0
    %2866 = vdwg.mxu0
    %2867 = vmatprep.subr.bf16.mxu0 %v2019
    %2868 = vmatpush1.bf16.msra.mxu0 %v2018
    %2869 = vmatprep.subr.bf16.mxu0 %v2021
    %2870 = vmatpush1.bf16.msra.mxu0 %v2020
    %2871 = vmatprep.subr.bf16.mxu0 %v2023
    %2872 = vmatpush1.bf16.msra.mxu0 %v2022
    %2873 = vmatprep.subr.bf16.mxu0 %v2025
    %2874 = vmatpush1.bf16.msra.mxu0 %v2024
    %2875 = vmatprep.subr.bf16.mxu0 %v2027
    %2876 = vmatpush1.bf16.msra.mxu0 %v2026
    %2877 = vmatprep.subr.bf16.mxu0 %v2029
    %2878 = vmatpush1.bf16.msra.mxu0 %v2028
    %2879 = vmatprep.subr.bf16.mxu0 %v2031
    %2880 = vmatpush1.bf16.msra.mxu0 %v2030
    %2881 = vmatprep.subr.bf16.mxu0 %v2033
    %2882 = vmatpush1.bf16.msra.mxu0 %v2032
    %2883 = vmatprep.subr.bf16.mxu0 %v2035
    %2884 = vmatpush1.bf16.msra.mxu0 %v2034
    %2885 = vmatprep.subr.bf16.mxu0 %v2037
    %2886 = vmatpush1.bf16.msra.mxu0 %v2036
    %2887 = vmatprep.subr.bf16.mxu0 %v2039
    %2888 = vmatpush1.bf16.msra.mxu0 %v2038
    %2889 = vmatprep.subr.bf16.mxu0 %v2041
    %2890 = vmatpush1.bf16.msra.mxu0 %v2040
    %2891 = vmatprep.subr.bf16.mxu0 %v2043
    %2892 = vmatpush1.bf16.msra.mxu0 %v2042
    %2893 = vmatprep.subr.bf16.mxu0 %v2045
    %2894 = vmatpush1.bf16.msra.mxu0 %v2044
    %2895 = vmatprep.subr.bf16.mxu0 %v2047
    %2896 = vmatpush1.bf16.msra.mxu0 %v2046
    %2897 = vmatprep.subr.bf16.mxu0 %v2049
    %2898 = vmatpush1.bf16.msra.mxu0 %v2048
    %2899 = vmatprep.mubr.bf16.mxu0 %v177
    %2900 = vmatmul.mubr.bf16.gmra.mrb[0].mxu0 %v176
    %v2901 = vpop.f32.mrb[0].mxu0
    %v2902 = vadd.f32 %v2861, %v2901
    %v2903 = vpop.f32.mrb[0].mxu0
    %v2904 = vadd.f32 %v2863, %v2903
    %v2905 = vpop.f32.mrb[0].mxu0
    %v2906 = vpop.f32.mrb[0].mxu0
    %2907 = vdwg.mxu0
    %2908 = vmatprep.subr.bf16.mxu0 %v2051
    %2909 = vmatpush1.bf16.msra.mxu0 %v2050
    %2910 = vmatprep.subr.bf16.mxu0 %v2053
    %2911 = vmatpush1.bf16.msra.mxu0 %v2052
    %2912 = vmatprep.subr.bf16.mxu0 %v2055
    %2913 = vmatpush1.bf16.msra.mxu0 %v2054
    %2914 = vmatprep.subr.bf16.mxu0 %v2057
    %2915 = vmatpush1.bf16.msra.mxu0 %v2056
    %2916 = vmatprep.subr.bf16.mxu0 %v2059
    %2917 = vmatpush1.bf16.msra.mxu0 %v2058
    %2918 = vmatprep.subr.bf16.mxu0 %v2061
    %2919 = vmatpush1.bf16.msra.mxu0 %v2060
    %2920 = vmatprep.subr.bf16.mxu0 %v2063
    %2921 = vmatpush1.bf16.msra.mxu0 %v2062
    %2922 = vmatprep.subr.bf16.mxu0 %v2065
    %2923 = vmatpush1.bf16.msra.mxu0 %v2064
    %2924 = vmatprep.subr.bf16.mxu0 %v2067
    %2925 = vmatpush1.bf16.msra.mxu0 %v2066
    %2926 = vmatprep.subr.bf16.mxu0 %v2069
    %2927 = vmatpush1.bf16.msra.mxu0 %v2068
    %2928 = vmatprep.subr.bf16.mxu0 %v2071
    %2929 = vmatpush1.bf16.msra.mxu0 %v2070
    %2930 = vmatprep.subr.bf16.mxu0 %v2073
    %2931 = vmatpush1.bf16.msra.mxu0 %v2072
    %2932 = vmatprep.subr.bf16.mxu0 %v2075
    %2933 = vmatpush1.bf16.msra.mxu0 %v2074
    %2934 = vmatprep.subr.bf16.mxu0 %v2077
    %2935 = vmatpush1.bf16.msra.mxu0 %v2076
    %2936 = vmatprep.subr.bf16.mxu0 %v2079
    %2937 = vmatpush1.bf16.msra.mxu0 %v2078
    %2938 = vmatprep.subr.bf16.mxu0 %v2081
    %2939 = vmatpush1.bf16.msra.mxu0 %v2080
    %2940 = vmatprep.mubr.bf16.mxu0 %v179
    %2941 = vmatmul.mubr.bf16.gmra.mrb[0].mxu0 %v178
    %v2942 = vpop.f32.mrb[0].mxu0
    %v2943 = vadd.f32 %v2902, %v2942
    %v2944 = vpop.f32.mrb[0].mxu0
    %v2945 = vadd.f32 %v2904, %v2944
    %v2946 = vpop.f32.mrb[0].mxu0
    %v2947 = vpop.f32.mrb[0].mxu0
    %2948 = vdwg.mxu0
    %2949 = vmatprep.subr.bf16.mxu0 %v2083
    %2950 = vmatpush1.bf16.msra.mxu0 %v2082
    %2951 = vmatprep.subr.bf16.mxu0 %v2085
    %2952 = vmatpush1.bf16.msra.mxu0 %v2084
    %2953 = vmatprep.subr.bf16.mxu0 %v2087
    %2954 = vmatpush1.bf16.msra.mxu0 %v2086
    %2955 = vmatprep.subr.bf16.mxu0 %v2089
    %2956 = vmatpush1.bf16.msra.mxu0 %v2088
    %2957 = vmatprep.subr.bf16.mxu0 %v2091
    %2958 = vmatpush1.bf16.msra.mxu0 %v2090
    %2959 = vmatprep.subr.bf16.mxu0 %v2093
    %2960 = vmatpush1.bf16.msra.mxu0 %v2092
    %2961 = vmatprep.subr.bf16.mxu0 %v2095
    %2962 = vmatpush1.bf16.msra.mxu0 %v2094
    %2963 = vmatprep.subr.bf16.mxu0 %v2097
    %2964 = vmatpush1.bf16.msra.mxu0 %v2096
    %2965 = vmatprep.subr.bf16.mxu0 %v2099
    %2966 = vmatpush1.bf16.msra.mxu0 %v2098
    %2967 = vmatprep.subr.bf16.mxu0 %v2101
    %2968 = vmatpush1.bf16.msra.mxu0 %v2100
    %2969 = vmatprep.subr.bf16.mxu0 %v2103
    %2970 = vmatpush1.bf16.msra.mxu0 %v2102
    %2971 = vmatprep.subr.bf16.mxu0 %v2105
    %2972 = vmatpush1.bf16.msra.mxu0 %v2104
    %2973 = vmatprep.subr.bf16.mxu0 %v2107
    %2974 = vmatpush1.bf16.msra.mxu0 %v2106
    %2975 = vmatprep.subr.bf16.mxu0 %v2109
    %2976 = vmatpush1.bf16.msra.mxu0 %v2108
    %2977 = vmatprep.subr.bf16.mxu0 %v2111
    %2978 = vmatpush1.bf16.msra.mxu0 %v2110
    %2979 = vmatprep.subr.bf16.mxu0 %v2113
    %2980 = vmatpush1.bf16.msra.mxu0 %v2112
    %2981 = vmatprep.mubr.bf16.mxu0 %v181
    %2982 = vmatmul.mubr.bf16.gmra.mrb[0].mxu0 %v180
    %v2983 = vpop.f32.mrb[0].mxu0
    %v2984 = vadd.f32 %v2943, %v2983
    %v2985 = vpop.f32.mrb[0].mxu0
    %v2986 = vadd.f32 %v2945, %v2985
    %v2987 = vpop.f32.mrb[0].mxu0
    %v2988 = vpop.f32.mrb[0].mxu0
    %2989 = vdwg.mxu0
    %v2990 = vmax.f32 %v2984, 0.0
    %v2991 = vmax.f32 %v2986, 0.0
    %v2992 = vpack.c.bf16 %v2990, %v2990
    %v2993 = vpack.c.bf16 %v2991, %v2991
    %v2994 = vld [vmem:[#allocation6] sm:$0xf]
    %v2995 = vld [vmem:[#allocation6 + $0x4] sm:$0xf]
    %v2996 = vld [vmem:[#allocation6 + $0x8] sm:$0xf]
    %v2997 = vld [vmem:[#allocation6 + $0xc] sm:$0xf]
    %v2998 = vld [vmem:[#allocation6 + $0x10] sm:$0xf]
    %v2999 = vld [vmem:[#allocation6 + $0x14] sm:$0xf]
    %v3000 = vld [vmem:[#allocation6 + $0x18] sm:$0xf]
    %v3001 = vld [vmem:[#allocation6 + $0x1c] sm:$0xf]
    %v3002 = vld [vmem:[#allocation6 + $0x20] sm:$0xf]
    %v3003 = vld [vmem:[#allocation6 + $0x24] sm:$0xf]
    %v3004 = vld [vmem:[#allocation6 + $0x28] sm:$0xf]
    %v3005 = vld [vmem:[#allocation6 + $0x2c] sm:$0xf]
    %v3006 = vld [vmem:[#allocation6 + $0x30] sm:$0xf]
    %v3007 = vld [vmem:[#allocation6 + $0x34] sm:$0xf]
    %v3008 = vld [vmem:[#allocation6 + $0x38] sm:$0xf]
    %v3009 = vld [vmem:[#allocation6 + $0x3c] sm:$0xf]
    %v3010 = vld [vmem:[#allocation6 + $0x40] sm:$0xf]
    %v3011 = vld [vmem:[#allocation6 + $0x44] sm:$0xf]
    %v3012 = vld [vmem:[#allocation6 + $0x48] sm:$0xf]
    %v3013 = vld [vmem:[#allocation6 + $0x4c] sm:$0xf]
    %v3014 = vld [vmem:[#allocation6 + $0x50] sm:$0xf]
    %v3015 = vld [vmem:[#allocation6 + $0x54] sm:$0xf]
    %v3016 = vld [vmem:[#allocation6 + $0x58] sm:$0xf]
    %v3017 = vld [vmem:[#allocation6 + $0x5c] sm:$0xf]
    %v3018 = vld [vmem:[#allocation6 + $0x60] sm:$0xf]
    %v3019 = vld [vmem:[#allocation6 + $0x64] sm:$0xf]
    %v3020 = vld [vmem:[#allocation6 + $0x68] sm:$0xf]
    %v3021 = vld [vmem:[#allocation6 + $0x6c] sm:$0xf]
    %v3022 = vld [vmem:[#allocation6 + $0x70] sm:$0xf]
    %v3023 = vld [vmem:[#allocation6 + $0x74] sm:$0xf]
    %v3024 = vld [vmem:[#allocation6 + $0x78] sm:$0xf]
    %v3025 = vld [vmem:[#allocation6 + $0x7c] sm:$0xf]
    %v3026 = vld [vmem:[#allocation7] sm:$0x1]
    %v3028 = vlaneseq
    %v3029 = vshrl.u32 %v3028, 7
    %v3030 = vsub.s32 0, %v3029
    %v3031 = vrot.slane %v3026, %v3030
    %v3065 = vunpack.c.l.b16 %v2994
    %v3066 = vunpack.c.l.b16 %v2995
    %v3067 = vunpack.c.l.b16 %v2996
    %v3068 = vunpack.c.l.b16 %v2997
    %v3069 = vunpack.c.l.b16 %v2998
    %v3070 = vunpack.c.l.b16 %v2999
    %v3071 = vunpack.c.l.b16 %v3000
    %v3072 = vunpack.c.l.b16 %v3001
    %v3073 = vunpack.c.l.b16 %v3002
    %v3074 = vunpack.c.l.b16 %v3003
    %v3075 = vunpack.c.l.b16 %v3004
    %v3076 = vunpack.c.l.b16 %v3005
    %v3077 = vunpack.c.l.b16 %v3006
    %v3078 = vunpack.c.l.b16 %v3007
    %v3079 = vunpack.c.l.b16 %v3008
    %v3080 = vunpack.c.l.b16 %v3009
    %v3081 = vunpack.c.l.b16 %v3010
    %v3082 = vunpack.c.l.b16 %v3011
    %v3083 = vunpack.c.l.b16 %v3012
    %v3084 = vunpack.c.l.b16 %v3013
    %v3085 = vunpack.c.l.b16 %v3014
    %v3086 = vunpack.c.l.b16 %v3015
    %v3087 = vunpack.c.l.b16 %v3016
    %v3088 = vunpack.c.l.b16 %v3017
    %v3089 = vunpack.c.l.b16 %v3018
    %v3090 = vunpack.c.l.b16 %v3019
    %v3091 = vunpack.c.l.b16 %v3020
    %v3092 = vunpack.c.l.b16 %v3021
    %v3093 = vunpack.c.l.b16 %v3022
    %v3094 = vunpack.c.l.b16 %v3023
    %v3095 = vunpack.c.l.b16 %v3024
    %v3096 = vunpack.c.l.b16 %v3025
    %v3097 = vpack.c.b16 %v3066, %v3065
    %v3098 = vpack.c.b16 %v3068, %v3067
    %v3099 = vpack.c.b16 %v3070, %v3069
    %v3100 = vpack.c.b16 %v3072, %v3071
    %v3101 = vpack.c.b16 %v3074, %v3073
    %v3102 = vpack.c.b16 %v3076, %v3075
    %v3103 = vpack.c.b16 %v3078, %v3077
    %v3104 = vpack.c.b16 %v3080, %v3079
    %v3105 = vpack.c.b16 %v3082, %v3081
    %v3106 = vpack.c.b16 %v3084, %v3083
    %v3107 = vpack.c.b16 %v3086, %v3085
    %v3108 = vpack.c.b16 %v3088, %v3087
    %v3109 = vpack.c.b16 %v3090, %v3089
    %v3110 = vpack.c.b16 %v3092, %v3091
    %v3111 = vpack.c.b16 %v3094, %v3093
    %v3112 = vpack.c.b16 %v3096, %v3095
    %3129 = vmatprep.subr.bf16.mxu0 0
    %3130 = vmatpush1.bf16.msra.mxu0 %v3097
    %3131 = vmatprep.subr.bf16.mxu0 0
    %3132 = vmatpush1.bf16.msra.mxu0 %v3098
    %3133 = vmatprep.subr.bf16.mxu0 0
    %3134 = vmatpush1.bf16.msra.mxu0 %v3099
    %3135 = vmatprep.subr.bf16.mxu0 0
    %3136 = vmatpush1.bf16.msra.mxu0 %v3100
    %3137 = vmatprep.subr.bf16.mxu0 0
    %3138 = vmatpush1.bf16.msra.mxu0 %v3101
    %3139 = vmatprep.subr.bf16.mxu0 0
    %3140 = vmatpush1.bf16.msra.mxu0 %v3102
    %3141 = vmatprep.subr.bf16.mxu0 0
    %3142 = vmatpush1.bf16.msra.mxu0 %v3103
    %3143 = vmatprep.subr.bf16.mxu0 0
    %3144 = vmatpush1.bf16.msra.mxu0 %v3104
    %3145 = vmatprep.subr.bf16.mxu0 0
    %3146 = vmatpush1.bf16.msra.mxu0 %v3105
    %3147 = vmatprep.subr.bf16.mxu0 0
    %3148 = vmatpush1.bf16.msra.mxu0 %v3106
    %3149 = vmatprep.subr.bf16.mxu0 0
    %3150 = vmatpush1.bf16.msra.mxu0 %v3107
    %3151 = vmatprep.subr.bf16.mxu0 0
    %3152 = vmatpush1.bf16.msra.mxu0 %v3108
    %3153 = vmatprep.subr.bf16.mxu0 0
    %3154 = vmatpush1.bf16.msra.mxu0 %v3109
    %3155 = vmatprep.subr.bf16.mxu0 0
    %3156 = vmatpush1.bf16.msra.mxu0 %v3110
    %3157 = vmatprep.subr.bf16.mxu0 0
    %3158 = vmatpush1.bf16.msra.mxu0 %v3111
    %3159 = vmatprep.subr.bf16.mxu0 0
    %3160 = vmatpush1.bf16.msra.mxu0 %v3112
    %3161 = vmatprep.mubr.bf16.mxu0 %v2993
    %3162 = vmatmul.mubr.bf16.gmra.mrb[0].mxu0 %v2992
    %v3163 = vpop.f32.mrb[0].mxu0
    %v3164 = vadd.f32 %v3031, %v3163
    %v3165 = vpop.f32.mrb[0].mxu0
    %v3166 = vpop.f32.mrb[0].mxu0
    %v3167 = vpop.f32.mrb[0].mxu0
    %3168 = vdwg.mxu0
    %v3169 = vmax.f32 %v3164, 0.0
    %v3170 = vpack.c.bf16 %v3169, %v3169
    %v3171 = vld [vmem:[#allocation9] sm:$0xf]
    %v3172 = vld [vmem:[#allocation9 + $0x4] sm:$0xf]
    %v3173 = vld [vmem:[#allocation9 + $0x8] sm:$0xf]
    %v3174 = vld [vmem:[#allocation9 + $0xc] sm:$0xf]
    %v3175 = vld [vmem:[#allocation9 + $0x10] sm:$0xf]
    %v3176 = vld [vmem:[#allocation9 + $0x14] sm:$0xf]
    %v3177 = vld [vmem:[#allocation9 + $0x18] sm:$0xf]
    %v3178 = vld [vmem:[#allocation9 + $0x1c] sm:$0xf]
    %v3179 = vld [vmem:[#allocation9 + $0x20] sm:$0xf]
    %v3180 = vld [vmem:[#allocation9 + $0x24] sm:$0xf]
    %v3181 = vld [vmem:[#allocation9 + $0x28] sm:$0xf]
    %v3182 = vld [vmem:[#allocation9 + $0x2c] sm:$0xf]
    %v3183 = vld [vmem:[#allocation9 + $0x30] sm:$0xf]
    %v3184 = vld [vmem:[#allocation9 + $0x34] sm:$0xf]
    %v3185 = vld [vmem:[#allocation9 + $0x38] sm:$0xf]
    %v3186 = vld [vmem:[#allocation9 + $0x3c] sm:$0xf]
    %v3187 = vld [vmem:[#allocation10] sm:$0x1]
    %v3189 = vlaneseq
    %v3190 = vshrl.u32 %v3189, 7
    %v3191 = vsub.s32 0, %v3190
    %v3192 = vrot.slane %v3187, %v3191
    %v3210 = vunpack.c.l.b16 %v3171
    %v3211 = vunpack.c.l.b16 %v3172
    %v3212 = vunpack.c.l.b16 %v3173
    %v3213 = vunpack.c.l.b16 %v3174
    %v3214 = vunpack.c.l.b16 %v3175
    %v3215 = vunpack.c.l.b16 %v3176
    %v3216 = vunpack.c.l.b16 %v3177
    %v3217 = vunpack.c.l.b16 %v3178
    %v3218 = vunpack.c.l.b16 %v3179
    %v3219 = vunpack.c.l.b16 %v3180
    %v3220 = vunpack.c.l.b16 %v3181
    %v3221 = vunpack.c.l.b16 %v3182
    %v3222 = vunpack.c.l.b16 %v3183
    %v3223 = vunpack.c.l.b16 %v3184
    %v3224 = vunpack.c.l.b16 %v3185
    %v3225 = vunpack.c.l.b16 %v3186
    %v3226 = vpack.c.b16 %v3211, %v3210
    %v3227 = vpack.c.b16 %v3213, %v3212
    %v3228 = vpack.c.b16 %v3215, %v3214
    %v3229 = vpack.c.b16 %v3217, %v3216
    %v3230 = vpack.c.b16 %v3219, %v3218
    %v3231 = vpack.c.b16 %v3221, %v3220
    %v3232 = vpack.c.b16 %v3223, %v3222
    %v3233 = vpack.c.b16 %v3225, %v3224
    %3242 = vmatprep.subr.bf16.mxu0 0
    %3243 = vmatpush1.bf16.msra.mxu0 %v3226
    %3244 = vmatprep.subr.bf16.mxu0 0
    %3245 = vmatpush1.bf16.msra.mxu0 %v3227
    %3246 = vmatprep.subr.bf16.mxu0 0
    %3247 = vmatpush1.bf16.msra.mxu0 %v3228
    %3248 = vmatprep.subr.bf16.mxu0 0
    %3249 = vmatpush1.bf16.msra.mxu0 %v3229
    %3250 = vmatprep.subr.bf16.mxu0 0
    %3251 = vmatpush1.bf16.msra.mxu0 %v3230
    %3252 = vmatprep.subr.bf16.mxu0 0
    %3253 = vmatpush1.bf16.msra.mxu0 %v3231
    %3254 = vmatprep.subr.bf16.mxu0 0
    %3255 = vmatpush1.bf16.msra.mxu0 %v3232
    %3256 = vmatprep.subr.bf16.mxu0 0
    %3257 = vmatpush1.bf16.msra.mxu0 %v3233
    %3258 = vmatprep.subr.bf16.mxu0 0
    %3259 = vmatpush1.bf16.msra.mxu0 0
    %3260 = vmatprep.subr.bf16.mxu0 0
    %3261 = vmatpush1.bf16.msra.mxu0 0
    %3262 = vmatprep.subr.bf16.mxu0 0
    %3263 = vmatpush1.bf16.msra.mxu0 0
    %3264 = vmatprep.subr.bf16.mxu0 0
    %3265 = vmatpush1.bf16.msra.mxu0 0
    %3266 = vmatprep.subr.bf16.mxu0 0
    %3267 = vmatpush1.bf16.msra.mxu0 0
    %3268 = vmatprep.subr.bf16.mxu0 0
    %3269 = vmatpush1.bf16.msra.mxu0 0
    %3270 = vmatprep.subr.bf16.mxu0 0
    %3271 = vmatpush1.bf16.msra.mxu0 0
    %3272 = vmatprep.subr.bf16.mxu0 0
    %3273 = vmatpush1.bf16.msra.mxu0 0
    %3274 = vmatprep.mubr.bf16.mxu0 0
    %3275 = vmatmul.mubr.bf16.gmra.mrb[0].mxu0 %v3170
    %v3276 = vpop.f32.mrb[0].mxu0
    %v3277 = vadd.f32 %v3192, %v3276
    %v3278 = vpop.f32.mrb[0].mxu0
    %v3279 = vpop.f32.mrb[0].mxu0
    %v3280 = vpop.f32.mrb[0].mxu0
    %3281 = vdwg.mxu0
    %v3282 = vmax.f32 %v3277, 0.0
    %v3283 = vpack.c.bf16 %v3282, %v3282
    %v3284 = vld [vmem:[#allocation12] sm:$0xf]
    %v3285 = vld [vmem:[#allocation12 + $0x4] sm:$0xf]
    %v3286 = vld [vmem:[#allocation12 + $0x8] sm:$0xf]
    %v3287 = vld [vmem:[#allocation12 + $0xc] sm:$0xf]
    %v3288 = vld [vmem:[#allocation12 + $0x10] sm:$0xf]
    %v3289 = vld [vmem:[#allocation12 + $0x14] sm:$0xf]
    %v3290 = vld [vmem:[#allocation12 + $0x18] sm:$0xf]
    %v3291 = vld [vmem:[#allocation12 + $0x1c] sm:$0xf]
    %v3292 = vld [vmem:[#allocation12 + $0x20] sm:$0xf]
    %v3293 = vld [vmem:[#allocation12 + $0x24] sm:$0xf]
    %v3294 = vld [vmem:[#allocation12 + $0x28] sm:$0xf]
    %v3295 = vld [vmem:[#allocation12 + $0x2c] sm:$0xf]
    %v3296 = vld [vmem:[#allocation12 + $0x30] sm:$0xf]
    %v3297 = vld [vmem:[#allocation12 + $0x34] sm:$0xf]
    %v3298 = vld [vmem:[#allocation12 + $0x38] sm:$0xf]
    %v3299 = vld [vmem:[#allocation12 + $0x3c] sm:$0xf]
    %v3300 = vld [vmem:[#allocation13] sm:$0x1]
    %v3302 = vlaneseq
    %v3303 = vshrl.u32 %v3302, 7
    %v3304 = vsub.s32 0, %v3303
    %v3305 = vrot.slane %v3300, %v3304
    %v3323 = vunpack.c.l.b16 %v3284
    %v3324 = vunpack.c.l.b16 %v3285
    %v3325 = vunpack.c.l.b16 %v3286
    %v3326 = vunpack.c.l.b16 %v3287
    %v3327 = vunpack.c.l.b16 %v3288
    %v3328 = vunpack.c.l.b16 %v3289
    %v3329 = vunpack.c.l.b16 %v3290
    %v3330 = vunpack.c.l.b16 %v3291
    %v3331 = vunpack.c.l.b16 %v3292
    %v3332 = vunpack.c.l.b16 %v3293
    %v3333 = vunpack.c.l.b16 %v3294
    %v3334 = vunpack.c.l.b16 %v3295
    %v3335 = vunpack.c.l.b16 %v3296
    %v3336 = vunpack.c.l.b16 %v3297
    %v3337 = vunpack.c.l.b16 %v3298
    %v3338 = vunpack.c.l.b16 %v3299
    %v3339 = vpack.c.b16 %v3324, %v3323
    %v3340 = vpack.c.b16 %v3326, %v3325
    %v3341 = vpack.c.b16 %v3328, %v3327
    %v3342 = vpack.c.b16 %v3330, %v3329
    %v3343 = vpack.c.b16 %v3332, %v3331
    %v3344 = vpack.c.b16 %v3334, %v3333
    %v3345 = vpack.c.b16 %v3336, %v3335
    %v3346 = vpack.c.b16 %v3338, %v3337
    %3355 = vmatprep.subr.bf16.mxu0 0
    %3356 = vmatpush1.bf16.msra.mxu0 %v3339
    %3357 = vmatprep.subr.bf16.mxu0 0
    %3358 = vmatpush1.bf16.msra.mxu0 %v3340
    %3359 = vmatprep.subr.bf16.mxu0 0
    %3360 = vmatpush1.bf16.msra.mxu0 %v3341
    %3361 = vmatprep.subr.bf16.mxu0 0
    %3362 = vmatpush1.bf16.msra.mxu0 %v3342
    %3363 = vmatprep.subr.bf16.mxu0 0
    %3364 = vmatpush1.bf16.msra.mxu0 %v3343
    %3365 = vmatprep.subr.bf16.mxu0 0
    %3366 = vmatpush1.bf16.msra.mxu0 %v3344
    %3367 = vmatprep.subr.bf16.mxu0 0
    %3368 = vmatpush1.bf16.msra.mxu0 %v3345
    %3369 = vmatprep.subr.bf16.mxu0 0
    %3370 = vmatpush1.bf16.msra.mxu0 %v3346
    %3371 = vmatprep.subr.bf16.mxu0 0
    %3372 = vmatpush1.bf16.msra.mxu0 0
    %3373 = vmatprep.subr.bf16.mxu0 0
    %3374 = vmatpush1.bf16.msra.mxu0 0
    %3375 = vmatprep.subr.bf16.mxu0 0
    %3376 = vmatpush1.bf16.msra.mxu0 0
    %3377 = vmatprep.subr.bf16.mxu0 0
    %3378 = vmatpush1.bf16.msra.mxu0 0
    %3379 = vmatprep.subr.bf16.mxu0 0
    %3380 = vmatpush1.bf16.msra.mxu0 0
    %3381 = vmatprep.subr.bf16.mxu0 0
    %3382 = vmatpush1.bf16.msra.mxu0 0
    %3383 = vmatprep.subr.bf16.mxu0 0
    %3384 = vmatpush1.bf16.msra.mxu0 0
    %3385 = vmatprep.subr.bf16.mxu0 0
    %3386 = vmatpush1.bf16.msra.mxu0 0
    %3387 = vmatprep.mubr.bf16.mxu0 0
    %3388 = vmatmul.mubr.bf16.gmra.mrb[0].mxu0 %v3283
    %v3389 = vpop.f32.mrb[0].mxu0
    %v3390 = vadd.f32 %v3305, %v3389
    %v3391 = vpop.f32.mrb[0].mxu0
    %v3392 = vpop.f32.mrb[0].mxu0
    %v3393 = vpop.f32.mrb[0].mxu0
    %3394 = vdwg.mxu0
    %v3395 = vpack.c.bf16 %v3390, %v3390
    %3396 = vst [vmem:[%s9] sm:$0xf] %v3395
    // Predicated region
    $region70: #{small_dnn_model2_forward.1} parent=1 // pred_check
      _
    $region71: #{small_dnn_model2_forward.1} parent=1 // pred_check_branch
      %3398 = sbr.rel (0) target = $region73
    $region72: #{small_dnn_model2_forward.1} parent=1 // pred_region
      _
    $region73: #{small_dnn_model2_forward.1} parent=1 // pred_fallthru
      _
    // Predicated region
    $region74: #{small_dnn_model2_forward.1} parent=1 // pred_check
      _
    $region75: #{small_dnn_model2_forward.1} parent=1 // pred_check_branch
      %3400 = sbr.rel (0) target = $region77
    $region76: #{small_dnn_model2_forward.1} parent=1 // pred_region
      _
    $region77: #{small_dnn_model2_forward.1} parent=1 // pred_fallthru
      _
    %3401 = vsyncpa [#allocation3], 1
    %3402 = vsyncpa [#allocation5], 1
    %3403 = vsyncpa [#allocation8], 1
    %3404 = vsyncpa [#allocation11], 1
    %3405 = vsyncpa [#allocation14], 1

</llo_original>
